<compile_context>
chip_gen: v7x
topology: tpu7x:2x2x1
jax: 0.10.0
libtpu: 0.0.40
codegen_flags: <defaults>
</compile_context>

<pallas_src>
import functools
import math

import jax
import jax.numpy as jnp
import numpy as np
from jax.experimental import pallas as pl
from jax.experimental.pallas import tpu as pltpu


def _edanet_block_kernel(*refs, layer_meta, H, W):
    """Fused EDANetBlock forward (all EDAModules) for one batch block.

    refs = (x_ref, [w1, b1, wd, b2, mask] * L, out_ref)

    x_ref   : (Nb, Cin0, H*W)    bf16  input block, lane-dense spatial axis
    w1_l    : (Cinit, Cin_l)     f32   1x1 conv weight, BN1 scale folded in
    b1_l    : (Cinit, 1)         f32   folded BN1 bias
    wd_l    : (Cnew, 9)          f32   depthwise 3x3 weight, BN2 scale folded
    b2_l    : (Cnew, 1)          f32   folded BN2 bias
    mask_l  : (9, H*W)           f32   0/1 zero-padding validity mask per tap
    out_ref : (Nb, Cfinal, H*W)  bf16  fused block output
    """
    x_ref = refs[0]
    out_ref = refs[-1]
    param_refs = refs[1:-1]

    Nb = x_ref.shape[0]
    HW = H * W

    for b in range(Nb):
        # Current feature map as an ordered list of channel sections; the
        # final output is exactly their concatenation along channels:
        #   [x1_L, x2_L, x1_{L-1}, x2_{L-1}, ..., x1_1, x2_1, X_0]
        # TODO(synk): for large C*H*W, stage the running feature map through a
        # VMEM scratch instead of register values to bound vreg pressure.
        sections = [x_ref[b, :, :].astype(jnp.float32)]        # [(Cin0, HW)]

        for l, (cin_l, cinit, cnew, d) in enumerate(layer_meta):
            w1_ref, b1_ref, wd_ref, b2_ref, mask_ref = param_refs[5 * l:5 * l + 5]
            w1 = w1_ref[...]                                   # (Cinit, Cin_l)
            wd = wd_ref[...]                                   # (Cnew, 9)

            # ---- primary_conv: 1x1 conv + folded BN + ReLU (VPU FMAs) ------
            # Channel counts are tiny here, so Cin broadcast-scalar FMAs beat
            # a heavily padded MXU matmul.
            # TODO(synk): switch to an MXU jnp.dot once Cin reaches O(100+).
            acc1 = None
            cbase = 0
            for sec in sections:
                for cc in range(sec.shape[0]):
                    c = cbase + cc
                    contrib = sec[cc:cc + 1, :] * w1[:, c:c + 1]
                    acc1 = contrib if acc1 is None else acc1 + contrib
                cbase += sec.shape[0]
            x1 = jnp.maximum(acc1 + b1_ref[...], 0.0)          # (Cinit, HW)

            # ---- cheap_operation: depthwise dilated 3x3 + BN + ReLU --------
            # ratio == 2 -> one output channel per x1 channel, so the whole
            # conv is 9 (roll, mask, FMA) passes over the (Cinit, HW) slab.
            # pltpu.roll runs on the otherwise idle XLU slot; masks are
            # precomputed 0/1 constants implementing the zero padding.
            acc2 = None
            for kh in range(3):
                for kw in range(3):
                    k = kh * 3 + kw
                    s = (kh - 1) * d * W + (kw - 1) * d        # flat neighbor offset
                    tap = wd[:, k:k + 1]                       # (Cnew, 1)
                    if s == 0:
                        contrib = x1 * tap                     # center tap, no pad
                    else:
                        shifted = pltpu.roll(x1, (-s) % HW, axis=1)
                        contrib = shifted * mask_ref[k:k + 1, :] * tap
                    acc2 = contrib if acc2 is None else acc2 + contrib
            x2 = jnp.maximum(acc2 + b2_ref[...], 0.0)          # (Cnew, HW)

            # torch.cat([x1, x2, input], dim=1)  -- stays on-chip, no HBM copy.
            sections = [x1, x2] + sections

        # Lane-dense bf16 writeback of the fully fused block output, one store
        # per concat section (no per-channel masked stores).
        off = 0
        for sec in sections:
            c = sec.shape[0]
            out_ref[b, off:off + c, :] = sec.astype(out_ref.dtype)
            off += c


def _fold_bn(gamma, beta, mean, var, eps=1e-5):
    scale = gamma / jnp.sqrt(var + eps)
    return scale, beta - mean * scale


def _pad_masks(H, W, d):
    """(9, H*W) 0/1 f32 masks implementing zero padding for a dilated 3x3."""
    hh, ww = np.meshgrid(np.arange(H), np.arange(W), indexing="ij")
    masks = []
    for kh in range(3):
        for kw in range(3):
            dh, dw = (kh - 1) * d, (kw - 1) * d
            valid = ((hh + dh >= 0) & (hh + dh < H) &
                     (ww + dw >= 0) & (ww + dw < W))
            masks.append(valid.reshape(-1))
    return jnp.asarray(np.stack(masks).astype(np.float32))


def edanet_block_forward(x, params_list, dilated_list, *, ratio=2,
                         max_block_bytes=4 << 20):
    """Fused EDANetBlock forward.

    x           : (N, Cin0, H, W) float array
    params_list : per layer (w1 (Cinit,Cin), bn1=(g,b,mean,var),
                             wd (Cnew,3,3), bn2=(g,b,mean,var))
    Returns (N, Cin0 + L*growth, H, W) bf16.
    """
    N, Cin0, H, W = x.shape
    HW = H * W
    assert ratio == 2, "TODO(synk): general ratio needs per-group channel replication"
    # TODO(synk): for H*W not a multiple of 128, fall back to a 2-D spatial path.
    assert HW % 128 == 0, "lane-dense path assumes H*W to be a multiple of 128"

    layer_meta = []
    kernel_args = []
    param_specs = []
    cin = Cin0
    for (w1, bn1, wd, bn2), d in zip(params_list, dilated_list):
        cinit, cin_w = w1.shape
        assert cin_w == cin
        cnew = wd.shape[0]
        assert cnew == cinit * (ratio - 1)
        s1, b1 = _fold_bn(*bn1)
        s2, b2 = _fold_bn(*bn2)
        args = [
            (w1 * s1[:, None]).astype(jnp.float32),                       # w1 folded
            b1.reshape(cinit, 1).astype(jnp.float32),                     # b1
            (wd.reshape(cnew, 9) * s2[:, None]).astype(jnp.float32),      # wd folded
            b2.reshape(cnew, 1).astype(jnp.float32),                      # b2
            _pad_masks(H, W, d),                                          # masks
        ]
        kernel_args.extend(args)
        param_specs.extend(
            pl.BlockSpec(a.shape, lambda n, nd=a.ndim: (0,) * nd) for a in args)
        layer_meta.append((cin, cinit, cnew, d))
        cin += cinit + cnew
    c_final = cin

    # Batch several images per grid step so each DMA is reasonably sized.
    # TODO(synk): for large feature maps, additionally tile H with a d-row halo
    # and re-derive the batch block against v7x's 64 MiB VMEM.
    out_img_bytes = c_final * HW * 2
    nb = 1
    for cand in range(1, N + 1):
        if N % cand == 0 and cand * out_img_bytes <= max_block_bytes:
            nb = cand

    kernel = functools.partial(_edanet_block_kernel,
                               layer_meta=tuple(layer_meta), H=H, W=W)

    out = pl.pallas_call(
        kernel,
        out_shape=jax.ShapeDtypeStruct((N, c_final, HW), jnp.bfloat16),
        grid=(N // nb,),
        in_specs=[pl.BlockSpec((nb, Cin0, HW), lambda n: (n, 0, 0))] + param_specs,
        out_specs=pl.BlockSpec((nb, c_final, HW), lambda n: (n, 0, 0)),
        compiler_params=pltpu.CompilerParams(
            dimension_semantics=("parallel",)),
    )(x.reshape(N, Cin0, HW).astype(jnp.bfloat16), *kernel_args)

    return out.reshape(N, c_final, H, W)


# ------------------------- pure-JAX reference (f32) -------------------------

def _eda_module_ref(x, w1, bn1, wd, bn2, *, dilated, eps=1e-5):
    g1, be1, m1, v1 = bn1
    g2, be2, m2, v2 = bn2
    d = dilated
    x1 = jnp.einsum('oc,nchw->nohw', w1, x)
    x1 = (x1 - m1[None, :, None, None]) * (g1 / jnp.sqrt(v1 + eps))[None, :, None, None]
    x1 = jnp.maximum(x1 + be1[None, :, None, None], 0.0)
    rhs = wd[:, None, :, :]                      # (Cnew, 1, 3, 3) OIHW depthwise
    y2 = jax.lax.conv_general_dilated(
        x1, rhs, window_strides=(1, 1), padding=[(d, d), (d, d)],
        rhs_dilation=(d, d), dimension_numbers=('NCHW', 'OIHW', 'NCHW'),
        feature_group_count=x1.shape[1])
    x2 = (y2 - m2[None, :, None, None]) * (g2 / jnp.sqrt(v2 + eps))[None, :, None, None]
    x2 = jnp.maximum(x2 + be2[None, :, None, None], 0.0)
    return jnp.concatenate([x1, x2, x], axis=1)


def edanet_block_ref(x, params_list, dilated_list):
    # Mirror the kernel's bf16 HBM input; intermediates stay f32 (kernel fuses
    # all layers on-chip in f32), only the final output is rounded to bf16.
    out = x.astype(jnp.bfloat16).astype(jnp.float32)
    for (w1, bn1, wd, bn2), d in zip(params_list, dilated_list):
        out = _eda_module_ref(out, w1, bn1, wd, bn2, dilated=d)
    return out


# ------------------------------ parameter setup ------------------------------

def make_eda_module_params(key, cin, growth_rate, ratio=2):
    init_channels = math.ceil(growth_rate / ratio)
    new_channels = init_channels * (ratio - 1)
    ks = jax.random.split(key, 10)
    w1 = jax.random.normal(ks[0], (init_channels, cin), jnp.float32) * 0.3
    wd = jax.random.normal(ks[1], (new_channels, 3, 3), jnp.float32) * 0.3
    bn1 = (jax.random.uniform(ks[2], (init_channels,), minval=0.5, maxval=1.5),
           jax.random.normal(ks[3], (init_channels,)) * 0.1,
           jax.random.normal(ks[4], (init_channels,)) * 0.1,
           jax.random.uniform(ks[5], (init_channels,), minval=0.5, maxval=1.5))
    bn2 = (jax.random.uniform(ks[6], (new_channels,), minval=0.5, maxval=1.5),
           jax.random.normal(ks[7], (new_channels,)) * 0.1,
           jax.random.normal(ks[8], (new_channels,)) * 0.1,
           jax.random.uniform(ks[9], (new_channels,), minval=0.5, maxval=1.5))
    return (w1, bn1, wd, bn2)


if __name__ == "__main__":
    # EDANetBlock(in_channels=4, num_dense_layer=2, dilated=[1, 2], growth_rate=8)
    in_channels, num_dense_layer, growth_rate = 4, 2, 8
    dilated = [1, 2]
    N, H, W = 2, 16, 16

    key = jax.random.PRNGKey(0)
    kx, *layer_keys = jax.random.split(key, num_dense_layer + 1)

    params_list = []
    cin = in_channels
    for i in range(num_dense_layer):
        params_list.append(make_eda_module_params(layer_keys[i], cin, growth_rate))
        cin += growth_rate          # each EDAModule outputs cin + growth_rate channels

    x = jax.random.normal(kx, (N, in_channels, H, W), jnp.float32)

    out = jax.block_until_ready(edanet_block_forward(x, params_list, dilated))
    assert out.shape == (N, in_channels + num_dense_layer * growth_rate, H, W), out.shape

    ref = edanet_block_ref(x, params_list, dilated)
    err = float(jnp.max(jnp.abs(out.astype(jnp.float32) - ref)))
    assert jnp.allclose(out.astype(jnp.float32), ref, atol=5e-2, rtol=5e-2), err

    print("KERNEL_OK")
</pallas_src>

<mosaic_0001>
module attributes {stable_mosaic.version = 11 : i64} {
  func.func @_edanet_block_kernel(%arg0: i32, %arg1: memref<2x4x256xbf16, #tpu.memory_space<vmem>>, %arg2: memref<4x4xf32, #tpu.memory_space<vmem>>, %arg3: memref<4x1xf32, #tpu.memory_space<vmem>>, %arg4: memref<4x9xf32, #tpu.memory_space<vmem>>, %arg5: memref<4x1xf32, #tpu.memory_space<vmem>>, %arg6: memref<9x256xf32, #tpu.memory_space<vmem>>, %arg7: memref<4x12xf32, #tpu.memory_space<vmem>>, %arg8: memref<4x1xf32, #tpu.memory_space<vmem>>, %arg9: memref<4x9xf32, #tpu.memory_space<vmem>>, %arg10: memref<4x1xf32, #tpu.memory_space<vmem>>, %arg11: memref<9x256xf32, #tpu.memory_space<vmem>>, %arg12: memref<2x20x256xbf16, #tpu.memory_space<vmem>>) attributes {dimension_semantics = [#tpu.dimension_semantics<parallel>], iteration_bounds = array<i64: 1>, scalar_prefetch = 0 : i64, scratch_operands = 0 : i64, tpu.core_type = #tpu.core_type<tc>, window_params = [{transform_indices = @transform_0, window_bounds = array<i64: 2, 4, 256>}, {pipeline_mode = #tpu.pipeline_mode<synchronous>, transform_indices = @transform_1, window_bounds = array<i64: 4, 4>}, {pipeline_mode = #tpu.pipeline_mode<synchronous>, transform_indices = @transform_2, window_bounds = array<i64: 4, 1>}, {pipeline_mode = #tpu.pipeline_mode<synchronous>, transform_indices = @transform_3, window_bounds = array<i64: 4, 9>}, {pipeline_mode = #tpu.pipeline_mode<synchronous>, transform_indices = @transform_4, window_bounds = array<i64: 4, 1>}, {pipeline_mode = #tpu.pipeline_mode<synchronous>, transform_indices = @transform_5, window_bounds = array<i64: 9, 256>}, {pipeline_mode = #tpu.pipeline_mode<synchronous>, transform_indices = @transform_6, window_bounds = array<i64: 4, 12>}, {pipeline_mode = #tpu.pipeline_mode<synchronous>, transform_indices = @transform_7, window_bounds = array<i64: 4, 1>}, {pipeline_mode = #tpu.pipeline_mode<synchronous>, transform_indices = @transform_8, window_bounds = array<i64: 4, 9>}, {pipeline_mode = #tpu.pipeline_mode<synchronous>, transform_indices = @transform_9, window_bounds = array<i64: 4, 1>}, {pipeline_mode = #tpu.pipeline_mode<synchronous>, transform_indices = @transform_10, window_bounds = array<i64: 9, 256>}, {transform_indices = @transform_11, window_bounds = array<i64: 2, 20, 256>}]} {
    %c0 = arith.constant 0 : index
    %c0_0 = arith.constant 0 : index
    %c0_1 = arith.constant 0 : index
    %0 = vector.load %arg1[%c0, %c0_0, %c0_1] : memref<2x4x256xbf16, #tpu.memory_space<vmem>>, vector<1x4x256xbf16>
    %1 = vector.shape_cast %0 : vector<1x4x256xbf16> to vector<4x256xbf16>
    %2 = arith.extf %1 : vector<4x256xbf16> to vector<4x256xf32>
    %c0_2 = arith.constant 0 : index
    %c0_3 = arith.constant 0 : index
    %3 = vector.load %arg2[%c0_2, %c0_3] : memref<4x4xf32, #tpu.memory_space<vmem>>, vector<4x4xf32>
    %c0_4 = arith.constant 0 : index
    %c0_5 = arith.constant 0 : index
    %4 = vector.load %arg4[%c0_4, %c0_5] : memref<4x9xf32, #tpu.memory_space<vmem>>, vector<4x9xf32>
    %5 = vector.extract_strided_slice %2 {offsets = [0, 0], sizes = [1, 256], strides = [1, 1]} : vector<4x256xf32> to vector<1x256xf32>
    %6 = vector.extract_strided_slice %3 {offsets = [0, 0], sizes = [4, 1], strides = [1, 1]} : vector<4x4xf32> to vector<4x1xf32>
    %7 = vector.broadcast %5 : vector<1x256xf32> to vector<4x256xf32>
    %8 = vector.broadcast %6 : vector<4x1xf32> to vector<4x256xf32>
    %9 = arith.mulf %7, %8 : vector<4x256xf32>
    %10 = vector.extract_strided_slice %2 {offsets = [1, 0], sizes = [1, 256], strides = [1, 1]} : vector<4x256xf32> to vector<1x256xf32>
    %11 = vector.extract_strided_slice %3 {offsets = [0, 1], sizes = [4, 1], strides = [1, 1]} : vector<4x4xf32> to vector<4x1xf32>
    %12 = vector.broadcast %10 : vector<1x256xf32> to vector<4x256xf32>
    %13 = vector.broadcast %11 : vector<4x1xf32> to vector<4x256xf32>
    %14 = arith.mulf %12, %13 : vector<4x256xf32>
    %15 = arith.addf %9, %14 : vector<4x256xf32>
    %16 = vector.extract_strided_slice %2 {offsets = [2, 0], sizes = [1, 256], strides = [1, 1]} : vector<4x256xf32> to vector<1x256xf32>
    %17 = vector.extract_strided_slice %3 {offsets = [0, 2], sizes = [4, 1], strides = [1, 1]} : vector<4x4xf32> to vector<4x1xf32>
    %18 = vector.broadcast %16 : vector<1x256xf32> to vector<4x256xf32>
    %19 = vector.broadcast %17 : vector<4x1xf32> to vector<4x256xf32>
    %20 = arith.mulf %18, %19 : vector<4x256xf32>
    %21 = arith.addf %15, %20 : vector<4x256xf32>
    %22 = vector.extract_strided_slice %2 {offsets = [3, 0], sizes = [1, 256], strides = [1, 1]} : vector<4x256xf32> to vector<1x256xf32>
    %23 = vector.extract_strided_slice %3 {offsets = [0, 3], sizes = [4, 1], strides = [1, 1]} : vector<4x4xf32> to vector<4x1xf32>
    %24 = vector.broadcast %22 : vector<1x256xf32> to vector<4x256xf32>
    %25 = vector.broadcast %23 : vector<4x1xf32> to vector<4x256xf32>
    %26 = arith.mulf %24, %25 : vector<4x256xf32>
    %27 = arith.addf %21, %26 : vector<4x256xf32>
    %c0_6 = arith.constant 0 : index
    %c0_7 = arith.constant 0 : index
    %28 = vector.load %arg3[%c0_6, %c0_7] : memref<4x1xf32, #tpu.memory_space<vmem>>, vector<4x1xf32>
    %29 = vector.broadcast %28 : vector<4x1xf32> to vector<4x256xf32>
    %30 = arith.addf %27, %29 : vector<4x256xf32>
    %cst = arith.constant 0.000000e+00 : f32
    %31 = vector.broadcast %cst : f32 to vector<4x256xf32>
    %32 = arith.maximumf %30, %31 : vector<4x256xf32>
    %33 = vector.extract_strided_slice %4 {offsets = [0, 0], sizes = [4, 1], strides = [1, 1]} : vector<4x9xf32> to vector<4x1xf32>
    %c17_i32 = arith.constant 17 : i32
    %34 = tpu.dynamic_rotate %32 by %c17_i32 dim 1 : vector<4x256xf32>, i32 -> vector<4x256xf32>
    %c0_8 = arith.constant 0 : index
    %c0_9 = arith.constant 0 : index
    %35 = vector.load %arg6[%c0_8, %c0_9] : memref<9x256xf32, #tpu.memory_space<vmem>>, vector<1x256xf32>
    %36 = vector.broadcast %35 : vector<1x256xf32> to vector<4x256xf32>
    %37 = arith.mulf %34, %36 : vector<4x256xf32>
    %38 = vector.broadcast %33 : vector<4x1xf32> to vector<4x256xf32>
    %39 = arith.mulf %37, %38 : vector<4x256xf32>
    %40 = vector.extract_strided_slice %4 {offsets = [0, 1], sizes = [4, 1], strides = [1, 1]} : vector<4x9xf32> to vector<4x1xf32>
    %c16_i32 = arith.constant 16 : i32
    %41 = tpu.dynamic_rotate %32 by %c16_i32 dim 1 : vector<4x256xf32>, i32 -> vector<4x256xf32>
    %c1 = arith.constant 1 : index
    %c0_10 = arith.constant 0 : index
    %42 = vector.load %arg6[%c1, %c0_10] : memref<9x256xf32, #tpu.memory_space<vmem>>, vector<1x256xf32>
    %43 = vector.broadcast %42 : vector<1x256xf32> to vector<4x256xf32>
    %44 = arith.mulf %41, %43 : vector<4x256xf32>
    %45 = vector.broadcast %40 : vector<4x1xf32> to vector<4x256xf32>
    %46 = arith.mulf %44, %45 : vector<4x256xf32>
    %47 = arith.addf %39, %46 : vector<4x256xf32>
    %48 = vector.extract_strided_slice %4 {offsets = [0, 2], sizes = [4, 1], strides = [1, 1]} : vector<4x9xf32> to vector<4x1xf32>
    %c15_i32 = arith.constant 15 : i32
    %49 = tpu.dynamic_rotate %32 by %c15_i32 dim 1 : vector<4x256xf32>, i32 -> vector<4x256xf32>
    %c2 = arith.constant 2 : index
    %c0_11 = arith.constant 0 : index
    %50 = vector.load %arg6[%c2, %c0_11] : memref<9x256xf32, #tpu.memory_space<vmem>>, vector<1x256xf32>
    %51 = vector.broadcast %50 : vector<1x256xf32> to vector<4x256xf32>
    %52 = arith.mulf %49, %51 : vector<4x256xf32>
    %53 = vector.broadcast %48 : vector<4x1xf32> to vector<4x256xf32>
    %54 = arith.mulf %52, %53 : vector<4x256xf32>
    %55 = arith.addf %47, %54 : vector<4x256xf32>
    %56 = vector.extract_strided_slice %4 {offsets = [0, 3], sizes = [4, 1], strides = [1, 1]} : vector<4x9xf32> to vector<4x1xf32>
    %c1_i32 = arith.constant 1 : i32
    %57 = tpu.dynamic_rotate %32 by %c1_i32 dim 1 : vector<4x256xf32>, i32 -> vector<4x256xf32>
    %c3 = arith.constant 3 : index
    %c0_12 = arith.constant 0 : index
    %58 = vector.load %arg6[%c3, %c0_12] : memref<9x256xf32, #tpu.memory_space<vmem>>, vector<1x256xf32>
    %59 = vector.broadcast %58 : vector<1x256xf32> to vector<4x256xf32>
    %60 = arith.mulf %57, %59 : vector<4x256xf32>
    %61 = vector.broadcast %56 : vector<4x1xf32> to vector<4x256xf32>
    %62 = arith.mulf %60, %61 : vector<4x256xf32>
    %63 = arith.addf %55, %62 : vector<4x256xf32>
    %64 = vector.extract_strided_slice %4 {offsets = [0, 4], sizes = [4, 1], strides = [1, 1]} : vector<4x9xf32> to vector<4x1xf32>
    %65 = vector.broadcast %64 : vector<4x1xf32> to vector<4x256xf32>
    %66 = arith.mulf %32, %65 : vector<4x256xf32>
    %67 = arith.addf %63, %66 : vector<4x256xf32>
    %68 = vector.extract_strided_slice %4 {offsets = [0, 5], sizes = [4, 1], strides = [1, 1]} : vector<4x9xf32> to vector<4x1xf32>
    %c255_i32 = arith.constant 255 : i32
    %69 = tpu.dynamic_rotate %32 by %c255_i32 dim 1 : vector<4x256xf32>, i32 -> vector<4x256xf32>
    %c5 = arith.constant 5 : index
    %c0_13 = arith.constant 0 : index
    %70 = vector.load %arg6[%c5, %c0_13] : memref<9x256xf32, #tpu.memory_space<vmem>>, vector<1x256xf32>
    %71 = vector.broadcast %70 : vector<1x256xf32> to vector<4x256xf32>
    %72 = arith.mulf %69, %71 : vector<4x256xf32>
    %73 = vector.broadcast %68 : vector<4x1xf32> to vector<4x256xf32>
    %74 = arith.mulf %72, %73 : vector<4x256xf32>
    %75 = arith.addf %67, %74 : vector<4x256xf32>
    %76 = vector.extract_strided_slice %4 {offsets = [0, 6], sizes = [4, 1], strides = [1, 1]} : vector<4x9xf32> to vector<4x1xf32>
    %c241_i32 = arith.constant 241 : i32
    %77 = tpu.dynamic_rotate %32 by %c241_i32 dim 1 : vector<4x256xf32>, i32 -> vector<4x256xf32>
    %c6 = arith.constant 6 : index
    %c0_14 = arith.constant 0 : index
    %78 = vector.load %arg6[%c6, %c0_14] : memref<9x256xf32, #tpu.memory_space<vmem>>, vector<1x256xf32>
    %79 = vector.broadcast %78 : vector<1x256xf32> to vector<4x256xf32>
    %80 = arith.mulf %77, %79 : vector<4x256xf32>
    %81 = vector.broadcast %76 : vector<4x1xf32> to vector<4x256xf32>
    %82 = arith.mulf %80, %81 : vector<4x256xf32>
    %83 = arith.addf %75, %82 : vector<4x256xf32>
    %84 = vector.extract_strided_slice %4 {offsets = [0, 7], sizes = [4, 1], strides = [1, 1]} : vector<4x9xf32> to vector<4x1xf32>
    %c240_i32 = arith.constant 240 : i32
    %85 = tpu.dynamic_rotate %32 by %c240_i32 dim 1 : vector<4x256xf32>, i32 -> vector<4x256xf32>
    %c7 = arith.constant 7 : index
    %c0_15 = arith.constant 0 : index
    %86 = vector.load %arg6[%c7, %c0_15] : memref<9x256xf32, #tpu.memory_space<vmem>>, vector<1x256xf32>
    %87 = vector.broadcast %86 : vector<1x256xf32> to vector<4x256xf32>
    %88 = arith.mulf %85, %87 : vector<4x256xf32>
    %89 = vector.broadcast %84 : vector<4x1xf32> to vector<4x256xf32>
    %90 = arith.mulf %88, %89 : vector<4x256xf32>
    %91 = arith.addf %83, %90 : vector<4x256xf32>
    %92 = vector.extract_strided_slice %4 {offsets = [0, 8], sizes = [4, 1], strides = [1, 1]} : vector<4x9xf32> to vector<4x1xf32>
    %c239_i32 = arith.constant 239 : i32
    %93 = tpu.dynamic_rotate %32 by %c239_i32 dim 1 : vector<4x256xf32>, i32 -> vector<4x256xf32>
    %c8 = arith.constant 8 : index
    %c0_16 = arith.constant 0 : index
    %94 = vector.load %arg6[%c8, %c0_16] : memref<9x256xf32, #tpu.memory_space<vmem>>, vector<1x256xf32>
    %95 = vector.broadcast %94 : vector<1x256xf32> to vector<4x256xf32>
    %96 = arith.mulf %93, %95 : vector<4x256xf32>
    %97 = vector.broadcast %92 : vector<4x1xf32> to vector<4x256xf32>
    %98 = arith.mulf %96, %97 : vector<4x256xf32>
    %99 = arith.addf %91, %98 : vector<4x256xf32>
    %c0_17 = arith.constant 0 : index
    %c0_18 = arith.constant 0 : index
    %100 = vector.load %arg5[%c0_17, %c0_18] : memref<4x1xf32, #tpu.memory_space<vmem>>, vector<4x1xf32>
    %101 = vector.broadcast %100 : vector<4x1xf32> to vector<4x256xf32>
    %102 = arith.addf %99, %101 : vector<4x256xf32>
    %cst_19 = arith.constant 0.000000e+00 : f32
    %103 = vector.broadcast %cst_19 : f32 to vector<4x256xf32>
    %104 = arith.maximumf %102, %103 : vector<4x256xf32>
    %c0_20 = arith.constant 0 : index
    %c0_21 = arith.constant 0 : index
    %105 = vector.load %arg7[%c0_20, %c0_21] : memref<4x12xf32, #tpu.memory_space<vmem>>, vector<4x12xf32>
    %c0_22 = arith.constant 0 : index
    %c0_23 = arith.constant 0 : index
    %106 = vector.load %arg9[%c0_22, %c0_23] : memref<4x9xf32, #tpu.memory_space<vmem>>, vector<4x9xf32>
    %107 = vector.extract_strided_slice %32 {offsets = [0, 0], sizes = [1, 256], strides = [1, 1]} : vector<4x256xf32> to vector<1x256xf32>
    %108 = vector.extract_strided_slice %105 {offsets = [0, 0], sizes = [4, 1], strides = [1, 1]} : vector<4x12xf32> to vector<4x1xf32>
    %109 = vector.broadcast %107 : vector<1x256xf32> to vector<4x256xf32>
    %110 = vector.broadcast %108 : vector<4x1xf32> to vector<4x256xf32>
    %111 = arith.mulf %109, %110 : vector<4x256xf32>
    %112 = vector.extract_strided_slice %32 {offsets = [1, 0], sizes = [1, 256], strides = [1, 1]} : vector<4x256xf32> to vector<1x256xf32>
    %113 = vector.extract_strided_slice %105 {offsets = [0, 1], sizes = [4, 1], strides = [1, 1]} : vector<4x12xf32> to vector<4x1xf32>
    %114 = vector.broadcast %112 : vector<1x256xf32> to vector<4x256xf32>
    %115 = vector.broadcast %113 : vector<4x1xf32> to vector<4x256xf32>
    %116 = arith.mulf %114, %115 : vector<4x256xf32>
    %117 = arith.addf %111, %116 : vector<4x256xf32>
    %118 = vector.extract_strided_slice %32 {offsets = [2, 0], sizes = [1, 256], strides = [1, 1]} : vector<4x256xf32> to vector<1x256xf32>
    %119 = vector.extract_strided_slice %105 {offsets = [0, 2], sizes = [4, 1], strides = [1, 1]} : vector<4x12xf32> to vector<4x1xf32>
    %120 = vector.broadcast %118 : vector<1x256xf32> to vector<4x256xf32>
    %121 = vector.broadcast %119 : vector<4x1xf32> to vector<4x256xf32>
    %122 = arith.mulf %120, %121 : vector<4x256xf32>
    %123 = arith.addf %117, %122 : vector<4x256xf32>
    %124 = vector.extract_strided_slice %32 {offsets = [3, 0], sizes = [1, 256], strides = [1, 1]} : vector<4x256xf32> to vector<1x256xf32>
    %125 = vector.extract_strided_slice %105 {offsets = [0, 3], sizes = [4, 1], strides = [1, 1]} : vector<4x12xf32> to vector<4x1xf32>
    %126 = vector.broadcast %124 : vector<1x256xf32> to vector<4x256xf32>
    %127 = vector.broadcast %125 : vector<4x1xf32> to vector<4x256xf32>
    %128 = arith.mulf %126, %127 : vector<4x256xf32>
    %129 = arith.addf %123, %128 : vector<4x256xf32>
    %130 = vector.extract_strided_slice %104 {offsets = [0, 0], sizes = [1, 256], strides = [1, 1]} : vector<4x256xf32> to vector<1x256xf32>
    %131 = vector.extract_strided_slice %105 {offsets = [0, 4], sizes = [4, 1], strides = [1, 1]} : vector<4x12xf32> to vector<4x1xf32>
    %132 = vector.broadcast %130 : vector<1x256xf32> to vector<4x256xf32>
    %133 = vector.broadcast %131 : vector<4x1xf32> to vector<4x256xf32>
    %134 = arith.mulf %132, %133 : vector<4x256xf32>
    %135 = arith.addf %129, %134 : vector<4x256xf32>
    %136 = vector.extract_strided_slice %104 {offsets = [1, 0], sizes = [1, 256], strides = [1, 1]} : vector<4x256xf32> to vector<1x256xf32>
    %137 = vector.extract_strided_slice %105 {offsets = [0, 5], sizes = [4, 1], strides = [1, 1]} : vector<4x12xf32> to vector<4x1xf32>
    %138 = vector.broadcast %136 : vector<1x256xf32> to vector<4x256xf32>
    %139 = vector.broadcast %137 : vector<4x1xf32> to vector<4x256xf32>
    %140 = arith.mulf %138, %139 : vector<4x256xf32>
    %141 = arith.addf %135, %140 : vector<4x256xf32>
    %142 = vector.extract_strided_slice %104 {offsets = [2, 0], sizes = [1, 256], strides = [1, 1]} : vector<4x256xf32> to vector<1x256xf32>
    %143 = vector.extract_strided_slice %105 {offsets = [0, 6], sizes = [4, 1], strides = [1, 1]} : vector<4x12xf32> to vector<4x1xf32>
    %144 = vector.broadcast %142 : vector<1x256xf32> to vector<4x256xf32>
    %145 = vector.broadcast %143 : vector<4x1xf32> to vector<4x256xf32>
    %146 = arith.mulf %144, %145 : vector<4x256xf32>
    %147 = arith.addf %141, %146 : vector<4x256xf32>
    %148 = vector.extract_strided_slice %104 {offsets = [3, 0], sizes = [1, 256], strides = [1, 1]} : vector<4x256xf32> to vector<1x256xf32>
    %149 = vector.extract_strided_slice %105 {offsets = [0, 7], sizes = [4, 1], strides = [1, 1]} : vector<4x12xf32> to vector<4x1xf32>
    %150 = vector.broadcast %148 : vector<1x256xf32> to vector<4x256xf32>
    %151 = vector.broadcast %149 : vector<4x1xf32> to vector<4x256xf32>
    %152 = arith.mulf %150, %151 : vector<4x256xf32>
    %153 = arith.addf %147, %152 : vector<4x256xf32>
    %154 = vector.extract_strided_slice %2 {offsets = [0, 0], sizes = [1, 256], strides = [1, 1]} : vector<4x256xf32> to vector<1x256xf32>
    %155 = vector.extract_strided_slice %105 {offsets = [0, 8], sizes = [4, 1], strides = [1, 1]} : vector<4x12xf32> to vector<4x1xf32>
    %156 = vector.broadcast %154 : vector<1x256xf32> to vector<4x256xf32>
    %157 = vector.broadcast %155 : vector<4x1xf32> to vector<4x256xf32>
    %158 = arith.mulf %156, %157 : vector<4x256xf32>
    %159 = arith.addf %153, %158 : vector<4x256xf32>
    %160 = vector.extract_strided_slice %2 {offsets = [1, 0], sizes = [1, 256], strides = [1, 1]} : vector<4x256xf32> to vector<1x256xf32>
    %161 = vector.extract_strided_slice %105 {offsets = [0, 9], sizes = [4, 1], strides = [1, 1]} : vector<4x12xf32> to vector<4x1xf32>
    %162 = vector.broadcast %160 : vector<1x256xf32> to vector<4x256xf32>
    %163 = vector.broadcast %161 : vector<4x1xf32> to vector<4x256xf32>
    %164 = arith.mulf %162, %163 : vector<4x256xf32>
    %165 = arith.addf %159, %164 : vector<4x256xf32>
    %166 = vector.extract_strided_slice %2 {offsets = [2, 0], sizes = [1, 256], strides = [1, 1]} : vector<4x256xf32> to vector<1x256xf32>
    %167 = vector.extract_strided_slice %105 {offsets = [0, 10], sizes = [4, 1], strides = [1, 1]} : vector<4x12xf32> to vector<4x1xf32>
    %168 = vector.broadcast %166 : vector<1x256xf32> to vector<4x256xf32>
    %169 = vector.broadcast %167 : vector<4x1xf32> to vector<4x256xf32>
    %170 = arith.mulf %168, %169 : vector<4x256xf32>
    %171 = arith.addf %165, %170 : vector<4x256xf32>
    %172 = vector.extract_strided_slice %2 {offsets = [3, 0], sizes = [1, 256], strides = [1, 1]} : vector<4x256xf32> to vector<1x256xf32>
    %173 = vector.extract_strided_slice %105 {offsets = [0, 11], sizes = [4, 1], strides = [1, 1]} : vector<4x12xf32> to vector<4x1xf32>
    %174 = vector.broadcast %172 : vector<1x256xf32> to vector<4x256xf32>
    %175 = vector.broadcast %173 : vector<4x1xf32> to vector<4x256xf32>
    %176 = arith.mulf %174, %175 : vector<4x256xf32>
    %177 = arith.addf %171, %176 : vector<4x256xf32>
    %c0_24 = arith.constant 0 : index
    %c0_25 = arith.constant 0 : index
    %178 = vector.load %arg8[%c0_24, %c0_25] : memref<4x1xf32, #tpu.memory_space<vmem>>, vector<4x1xf32>
    %179 = vector.broadcast %178 : vector<4x1xf32> to vector<4x256xf32>
    %180 = arith.addf %177, %179 : vector<4x256xf32>
    %cst_26 = arith.constant 0.000000e+00 : f32
    %181 = vector.broadcast %cst_26 : f32 to vector<4x256xf32>
    %182 = arith.maximumf %180, %181 : vector<4x256xf32>
    %183 = vector.extract_strided_slice %106 {offsets = [0, 0], sizes = [4, 1], strides = [1, 1]} : vector<4x9xf32> to vector<4x1xf32>
    %c34_i32 = arith.constant 34 : i32
    %184 = tpu.dynamic_rotate %182 by %c34_i32 dim 1 : vector<4x256xf32>, i32 -> vector<4x256xf32>
    %c0_27 = arith.constant 0 : index
    %c0_28 = arith.constant 0 : index
    %185 = vector.load %arg11[%c0_27, %c0_28] : memref<9x256xf32, #tpu.memory_space<vmem>>, vector<1x256xf32>
    %186 = vector.broadcast %185 : vector<1x256xf32> to vector<4x256xf32>
    %187 = arith.mulf %184, %186 : vector<4x256xf32>
    %188 = vector.broadcast %183 : vector<4x1xf32> to vector<4x256xf32>
    %189 = arith.mulf %187, %188 : vector<4x256xf32>
    %190 = vector.extract_strided_slice %106 {offsets = [0, 1], sizes = [4, 1], strides = [1, 1]} : vector<4x9xf32> to vector<4x1xf32>
    %c32_i32 = arith.constant 32 : i32
    %191 = tpu.dynamic_rotate %182 by %c32_i32 dim 1 : vector<4x256xf32>, i32 -> vector<4x256xf32>
    %c1_29 = arith.constant 1 : index
    %c0_30 = arith.constant 0 : index
    %192 = vector.load %arg11[%c1_29, %c0_30] : memref<9x256xf32, #tpu.memory_space<vmem>>, vector<1x256xf32>
    %193 = vector.broadcast %192 : vector<1x256xf32> to vector<4x256xf32>
    %194 = arith.mulf %191, %193 : vector<4x256xf32>
    %195 = vector.broadcast %190 : vector<4x1xf32> to vector<4x256xf32>
    %196 = arith.mulf %194, %195 : vector<4x256xf32>
    %197 = arith.addf %189, %196 : vector<4x256xf32>
    %198 = vector.extract_strided_slice %106 {offsets = [0, 2], sizes = [4, 1], strides = [1, 1]} : vector<4x9xf32> to vector<4x1xf32>
    %c30_i32 = arith.constant 30 : i32
    %199 = tpu.dynamic_rotate %182 by %c30_i32 dim 1 : vector<4x256xf32>, i32 -> vector<4x256xf32>
    %c2_31 = arith.constant 2 : index
    %c0_32 = arith.constant 0 : index
    %200 = vector.load %arg11[%c2_31, %c0_32] : memref<9x256xf32, #tpu.memory_space<vmem>>, vector<1x256xf32>
    %201 = vector.broadcast %200 : vector<1x256xf32> to vector<4x256xf32>
    %202 = arith.mulf %199, %201 : vector<4x256xf32>
    %203 = vector.broadcast %198 : vector<4x1xf32> to vector<4x256xf32>
    %204 = arith.mulf %202, %203 : vector<4x256xf32>
    %205 = arith.addf %197, %204 : vector<4x256xf32>
    %206 = vector.extract_strided_slice %106 {offsets = [0, 3], sizes = [4, 1], strides = [1, 1]} : vector<4x9xf32> to vector<4x1xf32>
    %c2_i32 = arith.constant 2 : i32
    %207 = tpu.dynamic_rotate %182 by %c2_i32 dim 1 : vector<4x256xf32>, i32 -> vector<4x256xf32>
    %c3_33 = arith.constant 3 : index
    %c0_34 = arith.constant 0 : index
    %208 = vector.load %arg11[%c3_33, %c0_34] : memref<9x256xf32, #tpu.memory_space<vmem>>, vector<1x256xf32>
    %209 = vector.broadcast %208 : vector<1x256xf32> to vector<4x256xf32>
    %210 = arith.mulf %207, %209 : vector<4x256xf32>
    %211 = vector.broadcast %206 : vector<4x1xf32> to vector<4x256xf32>
    %212 = arith.mulf %210, %211 : vector<4x256xf32>
    %213 = arith.addf %205, %212 : vector<4x256xf32>
    %214 = vector.extract_strided_slice %106 {offsets = [0, 4], sizes = [4, 1], strides = [1, 1]} : vector<4x9xf32> to vector<4x1xf32>
    %215 = vector.broadcast %214 : vector<4x1xf32> to vector<4x256xf32>
    %216 = arith.mulf %182, %215 : vector<4x256xf32>
    %217 = arith.addf %213, %216 : vector<4x256xf32>
    %218 = vector.extract_strided_slice %106 {offsets = [0, 5], sizes = [4, 1], strides = [1, 1]} : vector<4x9xf32> to vector<4x1xf32>
    %c254_i32 = arith.constant 254 : i32
    %219 = tpu.dynamic_rotate %182 by %c254_i32 dim 1 : vector<4x256xf32>, i32 -> vector<4x256xf32>
    %c5_35 = arith.constant 5 : index
    %c0_36 = arith.constant 0 : index
    %220 = vector.load %arg11[%c5_35, %c0_36] : memref<9x256xf32, #tpu.memory_space<vmem>>, vector<1x256xf32>
    %221 = vector.broadcast %220 : vector<1x256xf32> to vector<4x256xf32>
    %222 = arith.mulf %219, %221 : vector<4x256xf32>
    %223 = vector.broadcast %218 : vector<4x1xf32> to vector<4x256xf32>
    %224 = arith.mulf %222, %223 : vector<4x256xf32>
    %225 = arith.addf %217, %224 : vector<4x256xf32>
    %226 = vector.extract_strided_slice %106 {offsets = [0, 6], sizes = [4, 1], strides = [1, 1]} : vector<4x9xf32> to vector<4x1xf32>
    %c226_i32 = arith.constant 226 : i32
    %227 = tpu.dynamic_rotate %182 by %c226_i32 dim 1 : vector<4x256xf32>, i32 -> vector<4x256xf32>
    %c6_37 = arith.constant 6 : index
    %c0_38 = arith.constant 0 : index
    %228 = vector.load %arg11[%c6_37, %c0_38] : memref<9x256xf32, #tpu.memory_space<vmem>>, vector<1x256xf32>
    %229 = vector.broadcast %228 : vector<1x256xf32> to vector<4x256xf32>
    %230 = arith.mulf %227, %229 : vector<4x256xf32>
    %231 = vector.broadcast %226 : vector<4x1xf32> to vector<4x256xf32>
    %232 = arith.mulf %230, %231 : vector<4x256xf32>
    %233 = arith.addf %225, %232 : vector<4x256xf32>
    %234 = vector.extract_strided_slice %106 {offsets = [0, 7], sizes = [4, 1], strides = [1, 1]} : vector<4x9xf32> to vector<4x1xf32>
    %c224_i32 = arith.constant 224 : i32
    %235 = tpu.dynamic_rotate %182 by %c224_i32 dim 1 : vector<4x256xf32>, i32 -> vector<4x256xf32>
    %c7_39 = arith.constant 7 : index
    %c0_40 = arith.constant 0 : index
    %236 = vector.load %arg11[%c7_39, %c0_40] : memref<9x256xf32, #tpu.memory_space<vmem>>, vector<1x256xf32>
    %237 = vector.broadcast %236 : vector<1x256xf32> to vector<4x256xf32>
    %238 = arith.mulf %235, %237 : vector<4x256xf32>
    %239 = vector.broadcast %234 : vector<4x1xf32> to vector<4x256xf32>
    %240 = arith.mulf %238, %239 : vector<4x256xf32>
    %241 = arith.addf %233, %240 : vector<4x256xf32>
    %242 = vector.extract_strided_slice %106 {offsets = [0, 8], sizes = [4, 1], strides = [1, 1]} : vector<4x9xf32> to vector<4x1xf32>
    %c222_i32 = arith.constant 222 : i32
    %243 = tpu.dynamic_rotate %182 by %c222_i32 dim 1 : vector<4x256xf32>, i32 -> vector<4x256xf32>
    %c8_41 = arith.constant 8 : index
    %c0_42 = arith.constant 0 : index
    %244 = vector.load %arg11[%c8_41, %c0_42] : memref<9x256xf32, #tpu.memory_space<vmem>>, vector<1x256xf32>
    %245 = vector.broadcast %244 : vector<1x256xf32> to vector<4x256xf32>
    %246 = arith.mulf %243, %245 : vector<4x256xf32>
    %247 = vector.broadcast %242 : vector<4x1xf32> to vector<4x256xf32>
    %248 = arith.mulf %246, %247 : vector<4x256xf32>
    %249 = arith.addf %241, %248 : vector<4x256xf32>
    %c0_43 = arith.constant 0 : index
    %c0_44 = arith.constant 0 : index
    %250 = vector.load %arg10[%c0_43, %c0_44] : memref<4x1xf32, #tpu.memory_space<vmem>>, vector<4x1xf32>
    %251 = vector.broadcast %250 : vector<4x1xf32> to vector<4x256xf32>
    %252 = arith.addf %249, %251 : vector<4x256xf32>
    %cst_45 = arith.constant 0.000000e+00 : f32
    %253 = vector.broadcast %cst_45 : f32 to vector<4x256xf32>
    %254 = arith.maximumf %252, %253 : vector<4x256xf32>
    %255 = arith.truncf %182 : vector<4x256xf32> to vector<4x256xbf16>
    %c0_46 = arith.constant 0 : index
    %c0_47 = arith.constant 0 : index
    %c0_48 = arith.constant 0 : index
    %256 = vector.load %arg12[%c0_46, %c0_47, %c0_48] : memref<2x20x256xbf16, #tpu.memory_space<vmem>>, vector<1x4x256xbf16>
    %257 = vector.shape_cast %256 : vector<1x4x256xbf16> to vector<4x256xbf16>
    %258 = vector.shape_cast %255 : vector<4x256xbf16> to vector<1x4x256xbf16>
    tpu.vector_store %arg12[%c0_46, %c0_47, %c0_48], %258 {strides = array<i32>} : memref<2x20x256xbf16, #tpu.memory_space<vmem>>, vector<1x4x256xbf16>,
    %259 = arith.truncf %254 : vector<4x256xf32> to vector<4x256xbf16>
    %c0_49 = arith.constant 0 : index
    %c4 = arith.constant 4 : index
    %c0_50 = arith.constant 0 : index
    %260 = vector.load %arg12[%c0_49, %c4, %c0_50] : memref<2x20x256xbf16, #tpu.memory_space<vmem>>, vector<1x4x256xbf16>
    %261 = vector.shape_cast %260 : vector<1x4x256xbf16> to vector<4x256xbf16>
    %262 = vector.shape_cast %259 : vector<4x256xbf16> to vector<1x4x256xbf16>
    tpu.vector_store %arg12[%c0_49, %c4, %c0_50], %262 {strides = array<i32>} : memref<2x20x256xbf16, #tpu.memory_space<vmem>>, vector<1x4x256xbf16>,
    %263 = arith.truncf %32 : vector<4x256xf32> to vector<4x256xbf16>
    %c0_51 = arith.constant 0 : index
    %c8_52 = arith.constant 8 : index
    %c0_53 = arith.constant 0 : index
    %264 = vector.load %arg12[%c0_51, %c8_52, %c0_53] : memref<2x20x256xbf16, #tpu.memory_space<vmem>>, vector<1x4x256xbf16>
    %265 = vector.shape_cast %264 : vector<1x4x256xbf16> to vector<4x256xbf16>
    %266 = vector.shape_cast %263 : vector<4x256xbf16> to vector<1x4x256xbf16>
    tpu.vector_store %arg12[%c0_51, %c8_52, %c0_53], %266 {strides = array<i32>} : memref<2x20x256xbf16, #tpu.memory_space<vmem>>, vector<1x4x256xbf16>,
    %267 = arith.truncf %104 : vector<4x256xf32> to vector<4x256xbf16>
    %c0_54 = arith.constant 0 : index
    %c12 = arith.constant 12 : index
    %c0_55 = arith.constant 0 : index
    %268 = vector.load %arg12[%c0_54, %c12, %c0_55] : memref<2x20x256xbf16, #tpu.memory_space<vmem>>, vector<1x4x256xbf16>
    %269 = vector.shape_cast %268 : vector<1x4x256xbf16> to vector<4x256xbf16>
    %270 = vector.shape_cast %267 : vector<4x256xbf16> to vector<1x4x256xbf16>
    tpu.vector_store %arg12[%c0_54, %c12, %c0_55], %270 {strides = array<i32>} : memref<2x20x256xbf16, #tpu.memory_space<vmem>>, vector<1x4x256xbf16>,
    %271 = arith.truncf %2 : vector<4x256xf32> to vector<4x256xbf16>
    %c0_56 = arith.constant 0 : index
    %c16 = arith.constant 16 : index
    %c0_57 = arith.constant 0 : index
    %272 = vector.load %arg12[%c0_56, %c16, %c0_57] : memref<2x20x256xbf16, #tpu.memory_space<vmem>>, vector<1x4x256xbf16>
    %273 = vector.shape_cast %272 : vector<1x4x256xbf16> to vector<4x256xbf16>
    %274 = vector.shape_cast %271 : vector<4x256xbf16> to vector<1x4x256xbf16>
    tpu.vector_store %arg12[%c0_56, %c16, %c0_57], %274 {strides = array<i32>} : memref<2x20x256xbf16, #tpu.memory_space<vmem>>, vector<1x4x256xbf16>,
    %c1_58 = arith.constant 1 : index
    %c0_59 = arith.constant 0 : index
    %c0_60 = arith.constant 0 : index
    %275 = vector.load %arg1[%c1_58, %c0_59, %c0_60] : memref<2x4x256xbf16, #tpu.memory_space<vmem>>, vector<1x4x256xbf16>
    %276 = vector.shape_cast %275 : vector<1x4x256xbf16> to vector<4x256xbf16>
    %277 = arith.extf %276 : vector<4x256xbf16> to vector<4x256xf32>
    %c0_61 = arith.constant 0 : index
    %c0_62 = arith.constant 0 : index
    %278 = vector.load %arg2[%c0_61, %c0_62] : memref<4x4xf32, #tpu.memory_space<vmem>>, vector<4x4xf32>
    %c0_63 = arith.constant 0 : index
    %c0_64 = arith.constant 0 : index
    %279 = vector.load %arg4[%c0_63, %c0_64] : memref<4x9xf32, #tpu.memory_space<vmem>>, vector<4x9xf32>
    %280 = vector.extract_strided_slice %277 {offsets = [0, 0], sizes = [1, 256], strides = [1, 1]} : vector<4x256xf32> to vector<1x256xf32>
    %281 = vector.extract_strided_slice %278 {offsets = [0, 0], sizes = [4, 1], strides = [1, 1]} : vector<4x4xf32> to vector<4x1xf32>
    %282 = vector.broadcast %280 : vector<1x256xf32> to vector<4x256xf32>
    %283 = vector.broadcast %281 : vector<4x1xf32> to vector<4x256xf32>
    %284 = arith.mulf %282, %283 : vector<4x256xf32>
    %285 = vector.extract_strided_slice %277 {offsets = [1, 0], sizes = [1, 256], strides = [1, 1]} : vector<4x256xf32> to vector<1x256xf32>
    %286 = vector.extract_strided_slice %278 {offsets = [0, 1], sizes = [4, 1], strides = [1, 1]} : vector<4x4xf32> to vector<4x1xf32>
    %287 = vector.broadcast %285 : vector<1x256xf32> to vector<4x256xf32>
    %288 = vector.broadcast %286 : vector<4x1xf32> to vector<4x256xf32>
    %289 = arith.mulf %287, %288 : vector<4x256xf32>
    %290 = arith.addf %284, %289 : vector<4x256xf32>
    %291 = vector.extract_strided_slice %277 {offsets = [2, 0], sizes = [1, 256], strides = [1, 1]} : vector<4x256xf32> to vector<1x256xf32>
    %292 = vector.extract_strided_slice %278 {offsets = [0, 2], sizes = [4, 1], strides = [1, 1]} : vector<4x4xf32> to vector<4x1xf32>
    %293 = vector.broadcast %291 : vector<1x256xf32> to vector<4x256xf32>
    %294 = vector.broadcast %292 : vector<4x1xf32> to vector<4x256xf32>
    %295 = arith.mulf %293, %294 : vector<4x256xf32>
    %296 = arith.addf %290, %295 : vector<4x256xf32>
    %297 = vector.extract_strided_slice %277 {offsets = [3, 0], sizes = [1, 256], strides = [1, 1]} : vector<4x256xf32> to vector<1x256xf32>
    %298 = vector.extract_strided_slice %278 {offsets = [0, 3], sizes = [4, 1], strides = [1, 1]} : vector<4x4xf32> to vector<4x1xf32>
    %299 = vector.broadcast %297 : vector<1x256xf32> to vector<4x256xf32>
    %300 = vector.broadcast %298 : vector<4x1xf32> to vector<4x256xf32>
    %301 = arith.mulf %299, %300 : vector<4x256xf32>
    %302 = arith.addf %296, %301 : vector<4x256xf32>
    %c0_65 = arith.constant 0 : index
    %c0_66 = arith.constant 0 : index
    %303 = vector.load %arg3[%c0_65, %c0_66] : memref<4x1xf32, #tpu.memory_space<vmem>>, vector<4x1xf32>
    %304 = vector.broadcast %303 : vector<4x1xf32> to vector<4x256xf32>
    %305 = arith.addf %302, %304 : vector<4x256xf32>
    %cst_67 = arith.constant 0.000000e+00 : f32
    %306 = vector.broadcast %cst_67 : f32 to vector<4x256xf32>
    %307 = arith.maximumf %305, %306 : vector<4x256xf32>
    %308 = vector.extract_strided_slice %279 {offsets = [0, 0], sizes = [4, 1], strides = [1, 1]} : vector<4x9xf32> to vector<4x1xf32>
    %c17_i32_68 = arith.constant 17 : i32
    %309 = tpu.dynamic_rotate %307 by %c17_i32_68 dim 1 : vector<4x256xf32>, i32 -> vector<4x256xf32>
    %c0_69 = arith.constant 0 : index
    %c0_70 = arith.constant 0 : index
    %310 = vector.load %arg6[%c0_69, %c0_70] : memref<9x256xf32, #tpu.memory_space<vmem>>, vector<1x256xf32>
    %311 = vector.broadcast %310 : vector<1x256xf32> to vector<4x256xf32>
    %312 = arith.mulf %309, %311 : vector<4x256xf32>
    %313 = vector.broadcast %308 : vector<4x1xf32> to vector<4x256xf32>
    %314 = arith.mulf %312, %313 : vector<4x256xf32>
    %315 = vector.extract_strided_slice %279 {offsets = [0, 1], sizes = [4, 1], strides = [1, 1]} : vector<4x9xf32> to vector<4x1xf32>
    %c16_i32_71 = arith.constant 16 : i32
    %316 = tpu.dynamic_rotate %307 by %c16_i32_71 dim 1 : vector<4x256xf32>, i32 -> vector<4x256xf32>
    %c1_72 = arith.constant 1 : index
    %c0_73 = arith.constant 0 : index
    %317 = vector.load %arg6[%c1_72, %c0_73] : memref<9x256xf32, #tpu.memory_space<vmem>>, vector<1x256xf32>
    %318 = vector.broadcast %317 : vector<1x256xf32> to vector<4x256xf32>
    %319 = arith.mulf %316, %318 : vector<4x256xf32>
    %320 = vector.broadcast %315 : vector<4x1xf32> to vector<4x256xf32>
    %321 = arith.mulf %319, %320 : vector<4x256xf32>
    %322 = arith.addf %314, %321 : vector<4x256xf32>
    %323 = vector.extract_strided_slice %279 {offsets = [0, 2], sizes = [4, 1], strides = [1, 1]} : vector<4x9xf32> to vector<4x1xf32>
    %c15_i32_74 = arith.constant 15 : i32
    %324 = tpu.dynamic_rotate %307 by %c15_i32_74 dim 1 : vector<4x256xf32>, i32 -> vector<4x256xf32>
    %c2_75 = arith.constant 2 : index
    %c0_76 = arith.constant 0 : index
    %325 = vector.load %arg6[%c2_75, %c0_76] : memref<9x256xf32, #tpu.memory_space<vmem>>, vector<1x256xf32>
    %326 = vector.broadcast %325 : vector<1x256xf32> to vector<4x256xf32>
    %327 = arith.mulf %324, %326 : vector<4x256xf32>
    %328 = vector.broadcast %323 : vector<4x1xf32> to vector<4x256xf32>
    %329 = arith.mulf %327, %328 : vector<4x256xf32>
    %330 = arith.addf %322, %329 : vector<4x256xf32>
    %331 = vector.extract_strided_slice %279 {offsets = [0, 3], sizes = [4, 1], strides = [1, 1]} : vector<4x9xf32> to vector<4x1xf32>
    %c1_i32_77 = arith.constant 1 : i32
    %332 = tpu.dynamic_rotate %307 by %c1_i32_77 dim 1 : vector<4x256xf32>, i32 -> vector<4x256xf32>
    %c3_78 = arith.constant 3 : index
    %c0_79 = arith.constant 0 : index
    %333 = vector.load %arg6[%c3_78, %c0_79] : memref<9x256xf32, #tpu.memory_space<vmem>>, vector<1x256xf32>
    %334 = vector.broadcast %333 : vector<1x256xf32> to vector<4x256xf32>
    %335 = arith.mulf %332, %334 : vector<4x256xf32>
    %336 = vector.broadcast %331 : vector<4x1xf32> to vector<4x256xf32>
    %337 = arith.mulf %335, %336 : vector<4x256xf32>
    %338 = arith.addf %330, %337 : vector<4x256xf32>
    %339 = vector.extract_strided_slice %279 {offsets = [0, 4], sizes = [4, 1], strides = [1, 1]} : vector<4x9xf32> to vector<4x1xf32>
    %340 = vector.broadcast %339 : vector<4x1xf32> to vector<4x256xf32>
    %341 = arith.mulf %307, %340 : vector<4x256xf32>
    %342 = arith.addf %338, %341 : vector<4x256xf32>
    %343 = vector.extract_strided_slice %279 {offsets = [0, 5], sizes = [4, 1], strides = [1, 1]} : vector<4x9xf32> to vector<4x1xf32>
    %c255_i32_80 = arith.constant 255 : i32
    %344 = tpu.dynamic_rotate %307 by %c255_i32_80 dim 1 : vector<4x256xf32>, i32 -> vector<4x256xf32>
    %c5_81 = arith.constant 5 : index
    %c0_82 = arith.constant 0 : index
    %345 = vector.load %arg6[%c5_81, %c0_82] : memref<9x256xf32, #tpu.memory_space<vmem>>, vector<1x256xf32>
    %346 = vector.broadcast %345 : vector<1x256xf32> to vector<4x256xf32>
    %347 = arith.mulf %344, %346 : vector<4x256xf32>
    %348 = vector.broadcast %343 : vector<4x1xf32> to vector<4x256xf32>
    %349 = arith.mulf %347, %348 : vector<4x256xf32>
    %350 = arith.addf %342, %349 : vector<4x256xf32>
    %351 = vector.extract_strided_slice %279 {offsets = [0, 6], sizes = [4, 1], strides = [1, 1]} : vector<4x9xf32> to vector<4x1xf32>
    %c241_i32_83 = arith.constant 241 : i32
    %352 = tpu.dynamic_rotate %307 by %c241_i32_83 dim 1 : vector<4x256xf32>, i32 -> vector<4x256xf32>
    %c6_84 = arith.constant 6 : index
    %c0_85 = arith.constant 0 : index
    %353 = vector.load %arg6[%c6_84, %c0_85] : memref<9x256xf32, #tpu.memory_space<vmem>>, vector<1x256xf32>
    %354 = vector.broadcast %353 : vector<1x256xf32> to vector<4x256xf32>
    %355 = arith.mulf %352, %354 : vector<4x256xf32>
    %356 = vector.broadcast %351 : vector<4x1xf32> to vector<4x256xf32>
    %357 = arith.mulf %355, %356 : vector<4x256xf32>
    %358 = arith.addf %350, %357 : vector<4x256xf32>
    %359 = vector.extract_strided_slice %279 {offsets = [0, 7], sizes = [4, 1], strides = [1, 1]} : vector<4x9xf32> to vector<4x1xf32>
    %c240_i32_86 = arith.constant 240 : i32
    %360 = tpu.dynamic_rotate %307 by %c240_i32_86 dim 1 : vector<4x256xf32>, i32 -> vector<4x256xf32>
    %c7_87 = arith.constant 7 : index
    %c0_88 = arith.constant 0 : index
    %361 = vector.load %arg6[%c7_87, %c0_88] : memref<9x256xf32, #tpu.memory_space<vmem>>, vector<1x256xf32>
    %362 = vector.broadcast %361 : vector<1x256xf32> to vector<4x256xf32>
    %363 = arith.mulf %360, %362 : vector<4x256xf32>
    %364 = vector.broadcast %359 : vector<4x1xf32> to vector<4x256xf32>
    %365 = arith.mulf %363, %364 : vector<4x256xf32>
    %366 = arith.addf %358, %365 : vector<4x256xf32>
    %367 = vector.extract_strided_slice %279 {offsets = [0, 8], sizes = [4, 1], strides = [1, 1]} : vector<4x9xf32> to vector<4x1xf32>
    %c239_i32_89 = arith.constant 239 : i32
    %368 = tpu.dynamic_rotate %307 by %c239_i32_89 dim 1 : vector<4x256xf32>, i32 -> vector<4x256xf32>
    %c8_90 = arith.constant 8 : index
    %c0_91 = arith.constant 0 : index
    %369 = vector.load %arg6[%c8_90, %c0_91] : memref<9x256xf32, #tpu.memory_space<vmem>>, vector<1x256xf32>
    %370 = vector.broadcast %369 : vector<1x256xf32> to vector<4x256xf32>
    %371 = arith.mulf %368, %370 : vector<4x256xf32>
    %372 = vector.broadcast %367 : vector<4x1xf32> to vector<4x256xf32>
    %373 = arith.mulf %371, %372 : vector<4x256xf32>
    %374 = arith.addf %366, %373 : vector<4x256xf32>
    %c0_92 = arith.constant 0 : index
    %c0_93 = arith.constant 0 : index
    %375 = vector.load %arg5[%c0_92, %c0_93] : memref<4x1xf32, #tpu.memory_space<vmem>>, vector<4x1xf32>
    %376 = vector.broadcast %375 : vector<4x1xf32> to vector<4x256xf32>
    %377 = arith.addf %374, %376 : vector<4x256xf32>
    %cst_94 = arith.constant 0.000000e+00 : f32
    %378 = vector.broadcast %cst_94 : f32 to vector<4x256xf32>
    %379 = arith.maximumf %377, %378 : vector<4x256xf32>
    %c0_95 = arith.constant 0 : index
    %c0_96 = arith.constant 0 : index
    %380 = vector.load %arg7[%c0_95, %c0_96] : memref<4x12xf32, #tpu.memory_space<vmem>>, vector<4x12xf32>
    %c0_97 = arith.constant 0 : index
    %c0_98 = arith.constant 0 : index
    %381 = vector.load %arg9[%c0_97, %c0_98] : memref<4x9xf32, #tpu.memory_space<vmem>>, vector<4x9xf32>
    %382 = vector.extract_strided_slice %307 {offsets = [0, 0], sizes = [1, 256], strides = [1, 1]} : vector<4x256xf32> to vector<1x256xf32>
    %383 = vector.extract_strided_slice %380 {offsets = [0, 0], sizes = [4, 1], strides = [1, 1]} : vector<4x12xf32> to vector<4x1xf32>
    %384 = vector.broadcast %382 : vector<1x256xf32> to vector<4x256xf32>
    %385 = vector.broadcast %383 : vector<4x1xf32> to vector<4x256xf32>
    %386 = arith.mulf %384, %385 : vector<4x256xf32>
    %387 = vector.extract_strided_slice %307 {offsets = [1, 0], sizes = [1, 256], strides = [1, 1]} : vector<4x256xf32> to vector<1x256xf32>
    %388 = vector.extract_strided_slice %380 {offsets = [0, 1], sizes = [4, 1], strides = [1, 1]} : vector<4x12xf32> to vector<4x1xf32>
    %389 = vector.broadcast %387 : vector<1x256xf32> to vector<4x256xf32>
    %390 = vector.broadcast %388 : vector<4x1xf32> to vector<4x256xf32>
    %391 = arith.mulf %389, %390 : vector<4x256xf32>
    %392 = arith.addf %386, %391 : vector<4x256xf32>
    %393 = vector.extract_strided_slice %307 {offsets = [2, 0], sizes = [1, 256], strides = [1, 1]} : vector<4x256xf32> to vector<1x256xf32>
    %394 = vector.extract_strided_slice %380 {offsets = [0, 2], sizes = [4, 1], strides = [1, 1]} : vector<4x12xf32> to vector<4x1xf32>
    %395 = vector.broadcast %393 : vector<1x256xf32> to vector<4x256xf32>
    %396 = vector.broadcast %394 : vector<4x1xf32> to vector<4x256xf32>
    %397 = arith.mulf %395, %396 : vector<4x256xf32>
    %398 = arith.addf %392, %397 : vector<4x256xf32>
    %399 = vector.extract_strided_slice %307 {offsets = [3, 0], sizes = [1, 256], strides = [1, 1]} : vector<4x256xf32> to vector<1x256xf32>
    %400 = vector.extract_strided_slice %380 {offsets = [0, 3], sizes = [4, 1], strides = [1, 1]} : vector<4x12xf32> to vector<4x1xf32>
    %401 = vector.broadcast %399 : vector<1x256xf32> to vector<4x256xf32>
    %402 = vector.broadcast %400 : vector<4x1xf32> to vector<4x256xf32>
    %403 = arith.mulf %401, %402 : vector<4x256xf32>
    %404 = arith.addf %398, %403 : vector<4x256xf32>
    %405 = vector.extract_strided_slice %379 {offsets = [0, 0], sizes = [1, 256], strides = [1, 1]} : vector<4x256xf32> to vector<1x256xf32>
    %406 = vector.extract_strided_slice %380 {offsets = [0, 4], sizes = [4, 1], strides = [1, 1]} : vector<4x12xf32> to vector<4x1xf32>
    %407 = vector.broadcast %405 : vector<1x256xf32> to vector<4x256xf32>
    %408 = vector.broadcast %406 : vector<4x1xf32> to vector<4x256xf32>
    %409 = arith.mulf %407, %408 : vector<4x256xf32>
    %410 = arith.addf %404, %409 : vector<4x256xf32>
    %411 = vector.extract_strided_slice %379 {offsets = [1, 0], sizes = [1, 256], strides = [1, 1]} : vector<4x256xf32> to vector<1x256xf32>
    %412 = vector.extract_strided_slice %380 {offsets = [0, 5], sizes = [4, 1], strides = [1, 1]} : vector<4x12xf32> to vector<4x1xf32>
    %413 = vector.broadcast %411 : vector<1x256xf32> to vector<4x256xf32>
    %414 = vector.broadcast %412 : vector<4x1xf32> to vector<4x256xf32>
    %415 = arith.mulf %413, %414 : vector<4x256xf32>
    %416 = arith.addf %410, %415 : vector<4x256xf32>
    %417 = vector.extract_strided_slice %379 {offsets = [2, 0], sizes = [1, 256], strides = [1, 1]} : vector<4x256xf32> to vector<1x256xf32>
    %418 = vector.extract_strided_slice %380 {offsets = [0, 6], sizes = [4, 1], strides = [1, 1]} : vector<4x12xf32> to vector<4x1xf32>
    %419 = vector.broadcast %417 : vector<1x256xf32> to vector<4x256xf32>
    %420 = vector.broadcast %418 : vector<4x1xf32> to vector<4x256xf32>
    %421 = arith.mulf %419, %420 : vector<4x256xf32>
    %422 = arith.addf %416, %421 : vector<4x256xf32>
    %423 = vector.extract_strided_slice %379 {offsets = [3, 0], sizes = [1, 256], strides = [1, 1]} : vector<4x256xf32> to vector<1x256xf32>
    %424 = vector.extract_strided_slice %380 {offsets = [0, 7], sizes = [4, 1], strides = [1, 1]} : vector<4x12xf32> to vector<4x1xf32>
    %425 = vector.broadcast %423 : vector<1x256xf32> to vector<4x256xf32>
    %426 = vector.broadcast %424 : vector<4x1xf32> to vector<4x256xf32>
    %427 = arith.mulf %425, %426 : vector<4x256xf32>
    %428 = arith.addf %422, %427 : vector<4x256xf32>
    %429 = vector.extract_strided_slice %277 {offsets = [0, 0], sizes = [1, 256], strides = [1, 1]} : vector<4x256xf32> to vector<1x256xf32>
    %430 = vector.extract_strided_slice %380 {offsets = [0, 8], sizes = [4, 1], strides = [1, 1]} : vector<4x12xf32> to vector<4x1xf32>
    %431 = vector.broadcast %429 : vector<1x256xf32> to vector<4x256xf32>
    %432 = vector.broadcast %430 : vector<4x1xf32> to vector<4x256xf32>
    %433 = arith.mulf %431, %432 : vector<4x256xf32>
    %434 = arith.addf %428, %433 : vector<4x256xf32>
    %435 = vector.extract_strided_slice %277 {offsets = [1, 0], sizes = [1, 256], strides = [1, 1]} : vector<4x256xf32> to vector<1x256xf32>
    %436 = vector.extract_strided_slice %380 {offsets = [0, 9], sizes = [4, 1], strides = [1, 1]} : vector<4x12xf32> to vector<4x1xf32>
    %437 = vector.broadcast %435 : vector<1x256xf32> to vector<4x256xf32>
    %438 = vector.broadcast %436 : vector<4x1xf32> to vector<4x256xf32>
    %439 = arith.mulf %437, %438 : vector<4x256xf32>
    %440 = arith.addf %434, %439 : vector<4x256xf32>
    %441 = vector.extract_strided_slice %277 {offsets = [2, 0], sizes = [1, 256], strides = [1, 1]} : vector<4x256xf32> to vector<1x256xf32>
    %442 = vector.extract_strided_slice %380 {offsets = [0, 10], sizes = [4, 1], strides = [1, 1]} : vector<4x12xf32> to vector<4x1xf32>
    %443 = vector.broadcast %441 : vector<1x256xf32> to vector<4x256xf32>
    %444 = vector.broadcast %442 : vector<4x1xf32> to vector<4x256xf32>
    %445 = arith.mulf %443, %444 : vector<4x256xf32>
    %446 = arith.addf %440, %445 : vector<4x256xf32>
    %447 = vector.extract_strided_slice %277 {offsets = [3, 0], sizes = [1, 256], strides = [1, 1]} : vector<4x256xf32> to vector<1x256xf32>
    %448 = vector.extract_strided_slice %380 {offsets = [0, 11], sizes = [4, 1], strides = [1, 1]} : vector<4x12xf32> to vector<4x1xf32>
    %449 = vector.broadcast %447 : vector<1x256xf32> to vector<4x256xf32>
    %450 = vector.broadcast %448 : vector<4x1xf32> to vector<4x256xf32>
    %451 = arith.mulf %449, %450 : vector<4x256xf32>
    %452 = arith.addf %446, %451 : vector<4x256xf32>
    %c0_99 = arith.constant 0 : index
    %c0_100 = arith.constant 0 : index
    %453 = vector.load %arg8[%c0_99, %c0_100] : memref<4x1xf32, #tpu.memory_space<vmem>>, vector<4x1xf32>
    %454 = vector.broadcast %453 : vector<4x1xf32> to vector<4x256xf32>
    %455 = arith.addf %452, %454 : vector<4x256xf32>
    %cst_101 = arith.constant 0.000000e+00 : f32
    %456 = vector.broadcast %cst_101 : f32 to vector<4x256xf32>
    %457 = arith.maximumf %455, %456 : vector<4x256xf32>
    %458 = vector.extract_strided_slice %381 {offsets = [0, 0], sizes = [4, 1], strides = [1, 1]} : vector<4x9xf32> to vector<4x1xf32>
    %c34_i32_102 = arith.constant 34 : i32
    %459 = tpu.dynamic_rotate %457 by %c34_i32_102 dim 1 : vector<4x256xf32>, i32 -> vector<4x256xf32>
    %c0_103 = arith.constant 0 : index
    %c0_104 = arith.constant 0 : index
    %460 = vector.load %arg11[%c0_103, %c0_104] : memref<9x256xf32, #tpu.memory_space<vmem>>, vector<1x256xf32>
    %461 = vector.broadcast %460 : vector<1x256xf32> to vector<4x256xf32>
    %462 = arith.mulf %459, %461 : vector<4x256xf32>
    %463 = vector.broadcast %458 : vector<4x1xf32> to vector<4x256xf32>
    %464 = arith.mulf %462, %463 : vector<4x256xf32>
    %465 = vector.extract_strided_slice %381 {offsets = [0, 1], sizes = [4, 1], strides = [1, 1]} : vector<4x9xf32> to vector<4x1xf32>
    %c32_i32_105 = arith.constant 32 : i32
    %466 = tpu.dynamic_rotate %457 by %c32_i32_105 dim 1 : vector<4x256xf32>, i32 -> vector<4x256xf32>
    %c1_106 = arith.constant 1 : index
    %c0_107 = arith.constant 0 : index
    %467 = vector.load %arg11[%c1_106, %c0_107] : memref<9x256xf32, #tpu.memory_space<vmem>>, vector<1x256xf32>
    %468 = vector.broadcast %467 : vector<1x256xf32> to vector<4x256xf32>
    %469 = arith.mulf %466, %468 : vector<4x256xf32>
    %470 = vector.broadcast %465 : vector<4x1xf32> to vector<4x256xf32>
    %471 = arith.mulf %469, %470 : vector<4x256xf32>
    %472 = arith.addf %464, %471 : vector<4x256xf32>
    %473 = vector.extract_strided_slice %381 {offsets = [0, 2], sizes = [4, 1], strides = [1, 1]} : vector<4x9xf32> to vector<4x1xf32>
    %c30_i32_108 = arith.constant 30 : i32
    %474 = tpu.dynamic_rotate %457 by %c30_i32_108 dim 1 : vector<4x256xf32>, i32 -> vector<4x256xf32>
    %c2_109 = arith.constant 2 : index
    %c0_110 = arith.constant 0 : index
    %475 = vector.load %arg11[%c2_109, %c0_110] : memref<9x256xf32, #tpu.memory_space<vmem>>, vector<1x256xf32>
    %476 = vector.broadcast %475 : vector<1x256xf32> to vector<4x256xf32>
    %477 = arith.mulf %474, %476 : vector<4x256xf32>
    %478 = vector.broadcast %473 : vector<4x1xf32> to vector<4x256xf32>
    %479 = arith.mulf %477, %478 : vector<4x256xf32>
    %480 = arith.addf %472, %479 : vector<4x256xf32>
    %481 = vector.extract_strided_slice %381 {offsets = [0, 3], sizes = [4, 1], strides = [1, 1]} : vector<4x9xf32> to vector<4x1xf32>
    %c2_i32_111 = arith.constant 2 : i32
    %482 = tpu.dynamic_rotate %457 by %c2_i32_111 dim 1 : vector<4x256xf32>, i32 -> vector<4x256xf32>
    %c3_112 = arith.constant 3 : index
    %c0_113 = arith.constant 0 : index
    %483 = vector.load %arg11[%c3_112, %c0_113] : memref<9x256xf32, #tpu.memory_space<vmem>>, vector<1x256xf32>
    %484 = vector.broadcast %483 : vector<1x256xf32> to vector<4x256xf32>
    %485 = arith.mulf %482, %484 : vector<4x256xf32>
    %486 = vector.broadcast %481 : vector<4x1xf32> to vector<4x256xf32>
    %487 = arith.mulf %485, %486 : vector<4x256xf32>
    %488 = arith.addf %480, %487 : vector<4x256xf32>
    %489 = vector.extract_strided_slice %381 {offsets = [0, 4], sizes = [4, 1], strides = [1, 1]} : vector<4x9xf32> to vector<4x1xf32>
    %490 = vector.broadcast %489 : vector<4x1xf32> to vector<4x256xf32>
    %491 = arith.mulf %457, %490 : vector<4x256xf32>
    %492 = arith.addf %488, %491 : vector<4x256xf32>
    %493 = vector.extract_strided_slice %381 {offsets = [0, 5], sizes = [4, 1], strides = [1, 1]} : vector<4x9xf32> to vector<4x1xf32>
    %c254_i32_114 = arith.constant 254 : i32
    %494 = tpu.dynamic_rotate %457 by %c254_i32_114 dim 1 : vector<4x256xf32>, i32 -> vector<4x256xf32>
    %c5_115 = arith.constant 5 : index
    %c0_116 = arith.constant 0 : index
    %495 = vector.load %arg11[%c5_115, %c0_116] : memref<9x256xf32, #tpu.memory_space<vmem>>, vector<1x256xf32>
    %496 = vector.broadcast %495 : vector<1x256xf32> to vector<4x256xf32>
    %497 = arith.mulf %494, %496 : vector<4x256xf32>
    %498 = vector.broadcast %493 : vector<4x1xf32> to vector<4x256xf32>
    %499 = arith.mulf %497, %498 : vector<4x256xf32>
    %500 = arith.addf %492, %499 : vector<4x256xf32>
    %501 = vector.extract_strided_slice %381 {offsets = [0, 6], sizes = [4, 1], strides = [1, 1]} : vector<4x9xf32> to vector<4x1xf32>
    %c226_i32_117 = arith.constant 226 : i32
    %502 = tpu.dynamic_rotate %457 by %c226_i32_117 dim 1 : vector<4x256xf32>, i32 -> vector<4x256xf32>
    %c6_118 = arith.constant 6 : index
    %c0_119 = arith.constant 0 : index
    %503 = vector.load %arg11[%c6_118, %c0_119] : memref<9x256xf32, #tpu.memory_space<vmem>>, vector<1x256xf32>
    %504 = vector.broadcast %503 : vector<1x256xf32> to vector<4x256xf32>
    %505 = arith.mulf %502, %504 : vector<4x256xf32>
    %506 = vector.broadcast %501 : vector<4x1xf32> to vector<4x256xf32>
    %507 = arith.mulf %505, %506 : vector<4x256xf32>
    %508 = arith.addf %500, %507 : vector<4x256xf32>
    %509 = vector.extract_strided_slice %381 {offsets = [0, 7], sizes = [4, 1], strides = [1, 1]} : vector<4x9xf32> to vector<4x1xf32>
    %c224_i32_120 = arith.constant 224 : i32
    %510 = tpu.dynamic_rotate %457 by %c224_i32_120 dim 1 : vector<4x256xf32>, i32 -> vector<4x256xf32>
    %c7_121 = arith.constant 7 : index
    %c0_122 = arith.constant 0 : index
    %511 = vector.load %arg11[%c7_121, %c0_122] : memref<9x256xf32, #tpu.memory_space<vmem>>, vector<1x256xf32>
    %512 = vector.broadcast %511 : vector<1x256xf32> to vector<4x256xf32>
    %513 = arith.mulf %510, %512 : vector<4x256xf32>
    %514 = vector.broadcast %509 : vector<4x1xf32> to vector<4x256xf32>
    %515 = arith.mulf %513, %514 : vector<4x256xf32>
    %516 = arith.addf %508, %515 : vector<4x256xf32>
    %517 = vector.extract_strided_slice %381 {offsets = [0, 8], sizes = [4, 1], strides = [1, 1]} : vector<4x9xf32> to vector<4x1xf32>
    %c222_i32_123 = arith.constant 222 : i32
    %518 = tpu.dynamic_rotate %457 by %c222_i32_123 dim 1 : vector<4x256xf32>, i32 -> vector<4x256xf32>
    %c8_124 = arith.constant 8 : index
    %c0_125 = arith.constant 0 : index
    %519 = vector.load %arg11[%c8_124, %c0_125] : memref<9x256xf32, #tpu.memory_space<vmem>>, vector<1x256xf32>
    %520 = vector.broadcast %519 : vector<1x256xf32> to vector<4x256xf32>
    %521 = arith.mulf %518, %520 : vector<4x256xf32>
    %522 = vector.broadcast %517 : vector<4x1xf32> to vector<4x256xf32>
    %523 = arith.mulf %521, %522 : vector<4x256xf32>
    %524 = arith.addf %516, %523 : vector<4x256xf32>
    %c0_126 = arith.constant 0 : index
    %c0_127 = arith.constant 0 : index
    %525 = vector.load %arg10[%c0_126, %c0_127] : memref<4x1xf32, #tpu.memory_space<vmem>>, vector<4x1xf32>
    %526 = vector.broadcast %525 : vector<4x1xf32> to vector<4x256xf32>
    %527 = arith.addf %524, %526 : vector<4x256xf32>
    %cst_128 = arith.constant 0.000000e+00 : f32
    %528 = vector.broadcast %cst_128 : f32 to vector<4x256xf32>
    %529 = arith.maximumf %527, %528 : vector<4x256xf32>
    %530 = arith.truncf %457 : vector<4x256xf32> to vector<4x256xbf16>
    %c1_129 = arith.constant 1 : index
    %c0_130 = arith.constant 0 : index
    %c0_131 = arith.constant 0 : index
    %531 = vector.load %arg12[%c1_129, %c0_130, %c0_131] : memref<2x20x256xbf16, #tpu.memory_space<vmem>>, vector<1x4x256xbf16>
    %532 = vector.shape_cast %531 : vector<1x4x256xbf16> to vector<4x256xbf16>
    %533 = vector.shape_cast %530 : vector<4x256xbf16> to vector<1x4x256xbf16>
    tpu.vector_store %arg12[%c1_129, %c0_130, %c0_131], %533 {strides = array<i32>} : memref<2x20x256xbf16, #tpu.memory_space<vmem>>, vector<1x4x256xbf16>,
    %534 = arith.truncf %529 : vector<4x256xf32> to vector<4x256xbf16>
    %c1_132 = arith.constant 1 : index
    %c4_133 = arith.constant 4 : index
    %c0_134 = arith.constant 0 : index
    %535 = vector.load %arg12[%c1_132, %c4_133, %c0_134] : memref<2x20x256xbf16, #tpu.memory_space<vmem>>, vector<1x4x256xbf16>
    %536 = vector.shape_cast %535 : vector<1x4x256xbf16> to vector<4x256xbf16>
    %537 = vector.shape_cast %534 : vector<4x256xbf16> to vector<1x4x256xbf16>
    tpu.vector_store %arg12[%c1_132, %c4_133, %c0_134], %537 {strides = array<i32>} : memref<2x20x256xbf16, #tpu.memory_space<vmem>>, vector<1x4x256xbf16>,
    %538 = arith.truncf %307 : vector<4x256xf32> to vector<4x256xbf16>
    %c1_135 = arith.constant 1 : index
    %c8_136 = arith.constant 8 : index
    %c0_137 = arith.constant 0 : index
    %539 = vector.load %arg12[%c1_135, %c8_136, %c0_137] : memref<2x20x256xbf16, #tpu.memory_space<vmem>>, vector<1x4x256xbf16>
    %540 = vector.shape_cast %539 : vector<1x4x256xbf16> to vector<4x256xbf16>
    %541 = vector.shape_cast %538 : vector<4x256xbf16> to vector<1x4x256xbf16>
    tpu.vector_store %arg12[%c1_135, %c8_136, %c0_137], %541 {strides = array<i32>} : memref<2x20x256xbf16, #tpu.memory_space<vmem>>, vector<1x4x256xbf16>,
    %542 = arith.truncf %379 : vector<4x256xf32> to vector<4x256xbf16>
    %c1_138 = arith.constant 1 : index
    %c12_139 = arith.constant 12 : index
    %c0_140 = arith.constant 0 : index
    %543 = vector.load %arg12[%c1_138, %c12_139, %c0_140] : memref<2x20x256xbf16, #tpu.memory_space<vmem>>, vector<1x4x256xbf16>
    %544 = vector.shape_cast %543 : vector<1x4x256xbf16> to vector<4x256xbf16>
    %545 = vector.shape_cast %542 : vector<4x256xbf16> to vector<1x4x256xbf16>
    tpu.vector_store %arg12[%c1_138, %c12_139, %c0_140], %545 {strides = array<i32>} : memref<2x20x256xbf16, #tpu.memory_space<vmem>>, vector<1x4x256xbf16>,
    %546 = arith.truncf %277 : vector<4x256xf32> to vector<4x256xbf16>
    %c1_141 = arith.constant 1 : index
    %c16_142 = arith.constant 16 : index
    %c0_143 = arith.constant 0 : index
    %547 = vector.load %arg12[%c1_141, %c16_142, %c0_143] : memref<2x20x256xbf16, #tpu.memory_space<vmem>>, vector<1x4x256xbf16>
    %548 = vector.shape_cast %547 : vector<1x4x256xbf16> to vector<4x256xbf16>
    %549 = vector.shape_cast %546 : vector<4x256xbf16> to vector<1x4x256xbf16>
    tpu.vector_store %arg12[%c1_141, %c16_142, %c0_143], %549 {strides = array<i32>} : memref<2x20x256xbf16, #tpu.memory_space<vmem>>, vector<1x4x256xbf16>,
    return
  }
  func.func @transform_0(%arg0: i32) -> (i32, i32, i32) {
    %c0_i32 = arith.constant 0 : i32
    %c0_i32_0 = arith.constant 0 : i32
    %c0_i32_1 = arith.constant 0 : i32
    return %arg0, %c0_i32, %c0_i32_0 : i32, i32, i32
  }
  func.func @transform_1(%arg0: i32) -> (i32, i32) {
    %c0_i32 = arith.constant 0 : i32
    %c0_i32_0 = arith.constant 0 : i32
    %c0_i32_1 = arith.constant 0 : i32
    return %c0_i32, %c0_i32_0 : i32, i32
  }
  func.func @transform_2(%arg0: i32) -> (i32, i32) {
    %c0_i32 = arith.constant 0 : i32
    %c0_i32_0 = arith.constant 0 : i32
    %c0_i32_1 = arith.constant 0 : i32
    return %c0_i32, %c0_i32_0 : i32, i32
  }
  func.func @transform_3(%arg0: i32) -> (i32, i32) {
    %c0_i32 = arith.constant 0 : i32
    %c0_i32_0 = arith.constant 0 : i32
    %c0_i32_1 = arith.constant 0 : i32
    return %c0_i32, %c0_i32_0 : i32, i32
  }
  func.func @transform_4(%arg0: i32) -> (i32, i32) {
    %c0_i32 = arith.constant 0 : i32
    %c0_i32_0 = arith.constant 0 : i32
    %c0_i32_1 = arith.constant 0 : i32
    return %c0_i32, %c0_i32_0 : i32, i32
  }
  func.func @transform_5(%arg0: i32) -> (i32, i32) {
    %c0_i32 = arith.constant 0 : i32
    %c0_i32_0 = arith.constant 0 : i32
    %c0_i32_1 = arith.constant 0 : i32
    return %c0_i32, %c0_i32_0 : i32, i32
  }
  func.func @transform_6(%arg0: i32) -> (i32, i32) {
    %c0_i32 = arith.constant 0 : i32
    %c0_i32_0 = arith.constant 0 : i32
    %c0_i32_1 = arith.constant 0 : i32
    return %c0_i32, %c0_i32_0 : i32, i32
  }
  func.func @transform_7(%arg0: i32) -> (i32, i32) {
    %c0_i32 = arith.constant 0 : i32
    %c0_i32_0 = arith.constant 0 : i32
    %c0_i32_1 = arith.constant 0 : i32
    return %c0_i32, %c0_i32_0 : i32, i32
  }
  func.func @transform_8(%arg0: i32) -> (i32, i32) {
    %c0_i32 = arith.constant 0 : i32
    %c0_i32_0 = arith.constant 0 : i32
    %c0_i32_1 = arith.constant 0 : i32
    return %c0_i32, %c0_i32_0 : i32, i32
  }
  func.func @transform_9(%arg0: i32) -> (i32, i32) {
    %c0_i32 = arith.constant 0 : i32
    %c0_i32_0 = arith.constant 0 : i32
    %c0_i32_1 = arith.constant 0 : i32
    return %c0_i32, %c0_i32_0 : i32, i32
  }
  func.func @transform_10(%arg0: i32) -> (i32, i32) {
    %c0_i32 = arith.constant 0 : i32
    %c0_i32_0 = arith.constant 0 : i32
    %c0_i32_1 = arith.constant 0 : i32
    return %c0_i32, %c0_i32_0 : i32, i32
  }
  func.func @transform_11(%arg0: i32) -> (i32, i32, i32) {
    %c0_i32 = arith.constant 0 : i32
    %c0_i32_0 = arith.constant 0 : i32
    %c0_i32_1 = arith.constant 0 : i32
    return %arg0, %c0_i32, %c0_i32_0 : i32, i32, i32
  }
}

</mosaic_0001>

<llo_original>
// kernel: tpu_custom_call.1
$region0: #{tpu_custom_call.1}
  #allocation0 [shape = 'u32[]', space=smem, size = 0x4, offset = 0x4, fixed_abs, tag = 'smem constant byte address 0x4 - core index']
  #allocation1 [shape = 'u32[144,128]{1,0:T(1,128)}', space=vmem, size = 0x12000, scoped, tag = 'internal scratch']
  %s0 = inlined_call_operand.hbm [shape: bf16[2,4,256], index: 0, kind: input, shape index: {}]
  %s1 = inlined_call_operand.vmem [shape: f32[4,4], index: 1, kind: input, shape index: {}]
  %s2 = inlined_call_operand.vmem [shape: f32[4,1], index: 2, kind: input, shape index: {}]
  %s3 = inlined_call_operand.hbm [shape: f32[4,9], index: 3, kind: input, shape index: {}]
  %s4 = inlined_call_operand.vmem [shape: f32[4,1], index: 4, kind: input, shape index: {}]
  %s5 = inlined_call_operand.vmem [shape: f32[9,256], index: 5, kind: input, shape index: {}]
  %s6 = inlined_call_operand.vmem [shape: f32[4,12], index: 6, kind: input, shape index: {}]
  %s7 = inlined_call_operand.vmem [shape: f32[4,1], index: 7, kind: input, shape index: {}]
  %s8 = inlined_call_operand.vmem [shape: f32[4,9], index: 8, kind: input, shape index: {}]
  %s9 = inlined_call_operand.vmem [shape: f32[4,1], index: 9, kind: input, shape index: {}]
  %s10 = inlined_call_operand.hbm [shape: f32[9,256], index: 10, kind: input, shape index: {}]
  %s11 = inlined_call_operand.vmem [shape: bf16[2,20,256], index: 11, kind: output, shape index: {}]
  %s12 = sld [smem:[#allocation0]]
  $region66: #{tpu_custom_call.1} parent=0
    _
  %s14 = ssub.s32 1, %s12
  %s15 = scalar_select 0, %s14, %s12
  $region1: #{tpu_custom_call.1} parent=0
    #allocation2 [shape = 'u8[4096]{0}', space=vmem, size = 0x1000, scoped, tag = 'input window, operand 0, single buffered']
    #allocation3 [shape = 's32[1]{0}', space=sflag, size = 0x4, scoped, tag = 'scoped memory for tpu_custom_call.1']
    #allocation4 [shape = 'u8[2048]{0}', space=vmem, size = 0x800, scoped, tag = 'input window, operand 3, single buffered']
    #allocation5 [shape = 's32[1]{0}', space=sflag, size = 0x4, scoped, tag = 'scoped memory for tpu_custom_call.1']
    #allocation6 [shape = 'u8[16384]{0}', space=vmem, size = 0x4000, scoped, tag = 'input window, operand 10, single buffered']
    %16 = vsyncpa [#allocation3], 0
    %17 = vsyncpa [#allocation5], 0
    // Predicated region
    $region2: #{tpu_custom_call.1} parent=1 // pred_check
      _
    $region3: #{tpu_custom_call.1} parent=1 // pred_check_branch
      %19 = sbr.rel (0) target = $region5
    $region4: #{tpu_custom_call.1} parent=1 // pred_region
      %s21 = ssub.s32 128, 128
      %22 = vsyncadd [#allocation3], %s21
      %s23 = sshll.u32 [#allocation2], 4
      %s24 = int_to_ptr.vmem [resolvable:$true] %s23
      %29 = dma.hbm_to_vmem [thread:$0]  %s0, 128, %s24, [#allocation3], 64, 64, 4
    $region5: #{tpu_custom_call.1} parent=1 // pred_fallthru
      _
    // Predicated region
    $region6: #{tpu_custom_call.1} parent=1 // pred_check
      _
    $region7: #{tpu_custom_call.1} parent=1 // pred_check_branch
      %31 = sbr.rel (0) target = $region9
    $region8: #{tpu_custom_call.1} parent=1 // pred_region
      _
    $region9: #{tpu_custom_call.1} parent=1 // pred_fallthru
      _
    // Predicated region
    $region10: #{tpu_custom_call.1} parent=1 // pred_check
      _
    $region11: #{tpu_custom_call.1} parent=1 // pred_check_branch
      %33 = sbr.rel (0) target = $region13
    $region12: #{tpu_custom_call.1} parent=1 // pred_region
      _
    $region13: #{tpu_custom_call.1} parent=1 // pred_fallthru
      _
    // Predicated region
    $region14: #{tpu_custom_call.1} parent=1 // pred_check
      _
    $region15: #{tpu_custom_call.1} parent=1 // pred_check_branch
      %35 = sbr.rel (0) target = $region17
    $region16: #{tpu_custom_call.1} parent=1 // pred_region
      %s37 = ssub.s32 64, 64
      %38 = vsyncadd [#allocation5], %s37
      %s40 = sshll.u32 [#allocation4], 4
      %s41 = int_to_ptr.vmem [resolvable:$true] %s40
      %43 = dma.hbm_to_vmem [thread:$0]  %s3, 64, %s41, [#allocation5]
    $region17: #{tpu_custom_call.1} parent=1 // pred_fallthru
      _
    // Predicated region
    $region18: #{tpu_custom_call.1} parent=1 // pred_check
      _
    $region19: #{tpu_custom_call.1} parent=1 // pred_check_branch
      %45 = sbr.rel (0) target = $region21
    $region20: #{tpu_custom_call.1} parent=1 // pred_region
      _
    $region21: #{tpu_custom_call.1} parent=1 // pred_fallthru
      _
    // Predicated region
    $region22: #{tpu_custom_call.1} parent=1 // pred_check
      _
    $region23: #{tpu_custom_call.1} parent=1 // pred_check_branch
      %47 = sbr.rel (0) target = $region25
    $region24: #{tpu_custom_call.1} parent=1 // pred_region
      _
    $region25: #{tpu_custom_call.1} parent=1 // pred_fallthru
      _
    // Predicated region
    $region26: #{tpu_custom_call.1} parent=1 // pred_check
      _
    $region27: #{tpu_custom_call.1} parent=1 // pred_check_branch
      %49 = sbr.rel (0) target = $region29
    $region28: #{tpu_custom_call.1} parent=1 // pred_region
      _
    $region29: #{tpu_custom_call.1} parent=1 // pred_fallthru
      _
    // Predicated region
    $region30: #{tpu_custom_call.1} parent=1 // pred_check
      _
    $region31: #{tpu_custom_call.1} parent=1 // pred_check_branch
      %51 = sbr.rel (0) target = $region33
    $region32: #{tpu_custom_call.1} parent=1 // pred_region
      _
    $region33: #{tpu_custom_call.1} parent=1 // pred_fallthru
      _
    // Predicated region
    $region34: #{tpu_custom_call.1} parent=1 // pred_check
      _
    $region35: #{tpu_custom_call.1} parent=1 // pred_check_branch
      %53 = sbr.rel (0) target = $region37
    $region36: #{tpu_custom_call.1} parent=1 // pred_region
      _
    $region37: #{tpu_custom_call.1} parent=1 // pred_fallthru
      _
    // Predicated region
    $region38: #{tpu_custom_call.1} parent=1 // pred_check
      _
    $region39: #{tpu_custom_call.1} parent=1 // pred_check_branch
      %55 = sbr.rel (0) target = $region41
    $region40: #{tpu_custom_call.1} parent=1 // pred_region
      _
    $region41: #{tpu_custom_call.1} parent=1 // pred_fallthru
      _
    // Predicated region
    $region42: #{tpu_custom_call.1} parent=1 // pred_check
      _
    $region43: #{tpu_custom_call.1} parent=1 // pred_check_branch
      %57 = sbr.rel (0) target = $region45
    $region44: #{tpu_custom_call.1} parent=1 // pred_region
      %s59 = ssub.s32 512, 512
      %60 = vsyncadd [#allocation5], %s59
      %s61 = sshll.u32 [#allocation6], 4
      %s62 = int_to_ptr.vmem [resolvable:$true] %s61
      %67 = dma.hbm_to_vmem [thread:$0]  %s10, 512, %s62, [#allocation5], 256, 256, 16
    $region45: #{tpu_custom_call.1} parent=1 // pred_fallthru
      _
    // Predicated region
    $region46: #{tpu_custom_call.1} parent=1 // pred_check
      _
    $region47: #{tpu_custom_call.1} parent=1 // pred_check_branch
      %69 = sbr.rel (0) target = $region49
    $region48: #{tpu_custom_call.1} parent=1 // pred_region
      %70 = dma.done [#allocation3], 128
    $region49: #{tpu_custom_call.1} parent=1 // pred_fallthru
      _
    // Predicated region
    $region50: #{tpu_custom_call.1} parent=1 // pred_check
      _
    $region51: #{tpu_custom_call.1} parent=1 // pred_check_branch
      %72 = sbr.rel (0) target = $region53
    $region52: #{tpu_custom_call.1} parent=1 // pred_region
      %73 = dma.done [#allocation5], 64
    $region53: #{tpu_custom_call.1} parent=1 // pred_fallthru
      _
    // Predicated region
    $region54: #{tpu_custom_call.1} parent=1 // pred_check
      _
    $region55: #{tpu_custom_call.1} parent=1 // pred_check_branch
      %75 = sbr.rel (0) target = $region57
    $region56: #{tpu_custom_call.1} parent=1 // pred_region
      %76 = dma.done [#allocation5], 512
    $region57: #{tpu_custom_call.1} parent=1 // pred_fallthru
      _
    %v77 = vld [vmem:[#allocation2] sm:$0xf]
    %v78 = vunpack.c.l.bf16 %v77
    %v79 = vld [vmem:[%s1] sm:$0xf]
    %v80 = vld [vmem:[#allocation4] sm:$0xf]
    %v82 = vlaneseq
    %v83 = vshrl.u32 %v82, 7
    %v84 = vsub.s32 0, %v83
    %v85 = vrot.slane %v78, %v84
    %v86 = vlaneseq
    %v87 = vshrl.u32 %v86, 7
    %v88 = vsub.s32 4, %v87
    %v89 = vrot.slane %v78, %v88
    %v92 = vlaneseq
    %v93 = vshrl.u32 %v92, 7
    %v94 = vsub.s32 0, %v93
    %v95 = vrot.slane %v85, %v94
    %v96 = vlaneseq
    %v97 = vshrl.u32 %v96, 7
    %v98 = vsub.s32 0, %v97
    %v99 = vrot.slane %v89, %v98
    %101 = vset.pattern.permute.xlu0 0
    %102 = vperm.xlu0 %101, %v79
    %v103 = vpop.permute.xlu0 %102
    %v105 = vmul.f32 %v95, %v103
    %v106 = vmul.f32 %v99, %v103
    %v107 = vlaneseq
    %v108 = vshrl.u32 %v107, 7
    %v109 = vsub.s32 1, %v108
    %v110 = vrot.slane %v78, %v109
    %v111 = vlaneseq
    %v112 = vshrl.u32 %v111, 7
    %v113 = vsub.s32 5, %v112
    %v114 = vrot.slane %v78, %v113
    %v117 = vlaneseq
    %v118 = vshrl.u32 %v117, 7
    %v119 = vsub.s32 1, %v118
    %v120 = vrot.slane %v110, %v119
    %v121 = vlaneseq
    %v122 = vshrl.u32 %v121, 7
    %v123 = vsub.s32 1, %v122
    %v124 = vrot.slane %v114, %v123
    %125 = vset.pattern.permute.xlu0 1
    %126 = vperm.xlu0 %125, %v79
    %v127 = vpop.permute.xlu0 %126
    %v129 = vmul.f32 %v120, %v127
    %v130 = vmul.f32 %v124, %v127
    %v131 = vadd.f32 %v105, %v129
    %v132 = vadd.f32 %v106, %v130
    %v133 = vlaneseq
    %v134 = vshrl.u32 %v133, 7
    %v135 = vsub.s32 2, %v134
    %v136 = vrot.slane %v78, %v135
    %v137 = vlaneseq
    %v138 = vshrl.u32 %v137, 7
    %v139 = vsub.s32 6, %v138
    %v140 = vrot.slane %v78, %v139
    %v143 = vlaneseq
    %v144 = vshrl.u32 %v143, 7
    %v145 = vsub.s32 2, %v144
    %v146 = vrot.slane %v136, %v145
    %v147 = vlaneseq
    %v148 = vshrl.u32 %v147, 7
    %v149 = vsub.s32 2, %v148
    %v150 = vrot.slane %v140, %v149
    %151 = vset.pattern.permute.xlu0 2
    %152 = vperm.xlu0 %151, %v79
    %v153 = vpop.permute.xlu0 %152
    %v155 = vmul.f32 %v146, %v153
    %v156 = vmul.f32 %v150, %v153
    %v157 = vadd.f32 %v131, %v155
    %v158 = vadd.f32 %v132, %v156
    %v159 = vlaneseq
    %v160 = vshrl.u32 %v159, 7
    %v161 = vsub.s32 3, %v160
    %v162 = vrot.slane %v78, %v161
    %v163 = vlaneseq
    %v164 = vshrl.u32 %v163, 7
    %v165 = vsub.s32 7, %v164
    %v166 = vrot.slane %v78, %v165
    %v169 = vlaneseq
    %v170 = vshrl.u32 %v169, 7
    %v171 = vsub.s32 3, %v170
    %v172 = vrot.slane %v162, %v171
    %v173 = vlaneseq
    %v174 = vshrl.u32 %v173, 7
    %v175 = vsub.s32 3, %v174
    %v176 = vrot.slane %v166, %v175
    %177 = vset.pattern.permute.xlu0 3
    %178 = vperm.xlu0 %177, %v79
    %v179 = vpop.permute.xlu0 %178
    %v181 = vmul.f32 %v172, %v179
    %v182 = vmul.f32 %v176, %v179
    %v183 = vadd.f32 %v157, %v181
    %v184 = vadd.f32 %v158, %v182
    %v185 = vld [vmem:[%s2] sm:$0xf]
    %187 = vset.pattern.permute.xlu0 0
    %188 = vperm.xlu0 %187, %v185
    %v189 = vpop.permute.xlu0 %188
    %v191 = vadd.f32 %v183, %v189
    %v192 = vadd.f32 %v184, %v189
    %v193 = vmax.f32 %v191, 0.0
    %v194 = vmax.f32 %v192, 0.0
    %195 = vrot.lane.b32.xlu0 %v193, 17
    %v196 = vpop.permute.xlu0 %195
    %197 = vrot.lane.b32.xlu0 %v194, 17
    %v198 = vpop.permute.xlu0 %197
    %v199 = vlaneseq
    %v200 = vand.u32 %v199, 127
    %vm201 = vcmp.lt.s32.totalorder %v200, 17
    %v202 = vsel %vm201, %v196, %v198
    %v203 = vsel %vm201, %v198, %v196
    %v204 = vld [vmem:[%s5] ss:$8 sm:$0x3]
    %v206 = vlaneseq
    %v207 = vshrl.u32 %v206, 7
    %v208 = vsub.s32 0, %v207
    %v209 = vrot.slane %v204, %v208
    %v210 = vlaneseq
    %v211 = vshrl.u32 %v210, 7
    %v212 = vsub.s32 1, %v211
    %v213 = vrot.slane %v204, %v212
    %v216 = vmul.f32 %v203, %v209
    %v217 = vmul.f32 %v202, %v213
    %219 = vset.pattern.permute.xlu0 0
    %220 = vperm.xlu0 %219, %v80
    %v221 = vpop.permute.xlu0 %220
    %v223 = vmul.f32 %v216, %v221
    %v224 = vmul.f32 %v217, %v221
    %225 = vrot.lane.b32.xlu0 %v193, 16
    %v226 = vpop.permute.xlu0 %225
    %227 = vrot.lane.b32.xlu0 %v194, 16
    %v228 = vpop.permute.xlu0 %227
    %vm229 = vcmp.lt.s32.totalorder %v200, 16
    %v230 = vsel %vm229, %v226, %v228
    %v231 = vsel %vm229, %v228, %v226
    %s232 = scalar_lea.vmem %s5, 1
    %v233 = vld [vmem:[%s232] ss:$8 sm:$0x3]
    %v235 = vlaneseq
    %v236 = vshrl.u32 %v235, 7
    %v237 = vsub.s32 0, %v236
    %v238 = vrot.slane %v233, %v237
    %v239 = vlaneseq
    %v240 = vshrl.u32 %v239, 7
    %v241 = vsub.s32 1, %v240
    %v242 = vrot.slane %v233, %v241
    %v245 = vmul.f32 %v231, %v238
    %v246 = vmul.f32 %v230, %v242
    %247 = vset.pattern.permute.xlu0 1
    %248 = vperm.xlu0 %247, %v80
    %v249 = vpop.permute.xlu0 %248
    %v251 = vmul.f32 %v245, %v249
    %v252 = vmul.f32 %v246, %v249
    %v253 = vadd.f32 %v223, %v251
    %v254 = vadd.f32 %v224, %v252
    %255 = vrot.lane.b32.xlu0 %v193, 15
    %v256 = vpop.permute.xlu0 %255
    %257 = vrot.lane.b32.xlu0 %v194, 15
    %v258 = vpop.permute.xlu0 %257
    %vm259 = vcmp.lt.s32.totalorder %v200, 15
    %v260 = vsel %vm259, %v256, %v258
    %v261 = vsel %vm259, %v258, %v256
    %s262 = scalar_lea.vmem %s5, 2
    %v263 = vld [vmem:[%s262] ss:$8 sm:$0x3]
    %v265 = vlaneseq
    %v266 = vshrl.u32 %v265, 7
    %v267 = vsub.s32 0, %v266
    %v268 = vrot.slane %v263, %v267
    %v269 = vlaneseq
    %v270 = vshrl.u32 %v269, 7
    %v271 = vsub.s32 1, %v270
    %v272 = vrot.slane %v263, %v271
    %v275 = vmul.f32 %v261, %v268
    %v276 = vmul.f32 %v260, %v272
    %277 = vset.pattern.permute.xlu0 2
    %278 = vperm.xlu0 %277, %v80
    %v279 = vpop.permute.xlu0 %278
    %v281 = vmul.f32 %v275, %v279
    %v282 = vmul.f32 %v276, %v279
    %v283 = vadd.f32 %v253, %v281
    %v284 = vadd.f32 %v254, %v282
    %285 = vrot.lane.b32.xlu0 %v193, 1
    %v286 = vpop.permute.xlu0 %285
    %287 = vrot.lane.b32.xlu0 %v194, 1
    %v288 = vpop.permute.xlu0 %287
    %vm289 = vcmp.lt.s32.totalorder %v200, 1
    %v290 = vsel %vm289, %v286, %v288
    %v291 = vsel %vm289, %v288, %v286
    %s292 = scalar_lea.vmem %s5, 3
    %v293 = vld [vmem:[%s292] ss:$8 sm:$0x3]
    %v295 = vlaneseq
    %v296 = vshrl.u32 %v295, 7
    %v297 = vsub.s32 0, %v296
    %v298 = vrot.slane %v293, %v297
    %v299 = vlaneseq
    %v300 = vshrl.u32 %v299, 7
    %v301 = vsub.s32 1, %v300
    %v302 = vrot.slane %v293, %v301
    %v305 = vmul.f32 %v291, %v298
    %v306 = vmul.f32 %v290, %v302
    %307 = vset.pattern.permute.xlu0 3
    %308 = vperm.xlu0 %307, %v80
    %v309 = vpop.permute.xlu0 %308
    %v311 = vmul.f32 %v305, %v309
    %v312 = vmul.f32 %v306, %v309
    %v313 = vadd.f32 %v283, %v311
    %v314 = vadd.f32 %v284, %v312
    %315 = vset.pattern.permute.xlu0 4
    %316 = vperm.xlu0 %315, %v80
    %v317 = vpop.permute.xlu0 %316
    %v319 = vmul.f32 %v193, %v317
    %v320 = vmul.f32 %v194, %v317
    %v321 = vadd.f32 %v313, %v319
    %v322 = vadd.f32 %v314, %v320
    %323 = vrot.lane.b32.xlu0 %v193, 127
    %v324 = vpop.permute.xlu0 %323
    %325 = vrot.lane.b32.xlu0 %v194, 127
    %v326 = vpop.permute.xlu0 %325
    %vm327 = vcmp.lt.s32.totalorder %v200, 127
    %v328 = vsel %vm327, %v324, %v326
    %v329 = vsel %vm327, %v326, %v324
    %s330 = scalar_lea.vmem %s5, 5
    %v331 = vld [vmem:[%s330] ss:$8 sm:$0x3]
    %v333 = vlaneseq
    %v334 = vshrl.u32 %v333, 7
    %v335 = vsub.s32 0, %v334
    %v336 = vrot.slane %v331, %v335
    %v337 = vlaneseq
    %v338 = vshrl.u32 %v337, 7
    %v339 = vsub.s32 1, %v338
    %v340 = vrot.slane %v331, %v339
    %v343 = vmul.f32 %v328, %v336
    %v344 = vmul.f32 %v329, %v340
    %345 = vset.pattern.permute.xlu0 5
    %346 = vperm.xlu0 %345, %v80
    %v347 = vpop.permute.xlu0 %346
    %v349 = vmul.f32 %v343, %v347
    %v350 = vmul.f32 %v344, %v347
    %v351 = vadd.f32 %v321, %v349
    %v352 = vadd.f32 %v322, %v350
    %353 = vrot.lane.b32.xlu0 %v193, 113
    %v354 = vpop.permute.xlu0 %353
    %355 = vrot.lane.b32.xlu0 %v194, 113
    %v356 = vpop.permute.xlu0 %355
    %vm357 = vcmp.lt.s32.totalorder %v200, 113
    %v358 = vsel %vm357, %v354, %v356
    %v359 = vsel %vm357, %v356, %v354
    %s360 = scalar_lea.vmem %s5, 6
    %v361 = vld [vmem:[%s360] ss:$8 sm:$0x3]
    %v363 = vlaneseq
    %v364 = vshrl.u32 %v363, 7
    %v365 = vsub.s32 0, %v364
    %v366 = vrot.slane %v361, %v365
    %v367 = vlaneseq
    %v368 = vshrl.u32 %v367, 7
    %v369 = vsub.s32 1, %v368
    %v370 = vrot.slane %v361, %v369
    %v373 = vmul.f32 %v358, %v366
    %v374 = vmul.f32 %v359, %v370
    %375 = vset.pattern.permute.xlu0 6
    %376 = vperm.xlu0 %375, %v80
    %v377 = vpop.permute.xlu0 %376
    %v379 = vmul.f32 %v373, %v377
    %v380 = vmul.f32 %v374, %v377
    %v381 = vadd.f32 %v351, %v379
    %v382 = vadd.f32 %v352, %v380
    %383 = vrot.lane.b32.xlu0 %v193, 112
    %v384 = vpop.permute.xlu0 %383
    %385 = vrot.lane.b32.xlu0 %v194, 112
    %v386 = vpop.permute.xlu0 %385
    %vm387 = vcmp.lt.s32.totalorder %v200, 112
    %v388 = vsel %vm387, %v384, %v386
    %v389 = vsel %vm387, %v386, %v384
    %s390 = scalar_lea.vmem %s5, 7
    %v391 = vld [vmem:[%s390] ss:$8 sm:$0x3]
    %v393 = vlaneseq
    %v394 = vshrl.u32 %v393, 7
    %v395 = vsub.s32 0, %v394
    %v396 = vrot.slane %v391, %v395
    %v397 = vlaneseq
    %v398 = vshrl.u32 %v397, 7
    %v399 = vsub.s32 1, %v398
    %v400 = vrot.slane %v391, %v399
    %v403 = vmul.f32 %v388, %v396
    %v404 = vmul.f32 %v389, %v400
    %405 = vset.pattern.permute.xlu0 7
    %406 = vperm.xlu0 %405, %v80
    %v407 = vpop.permute.xlu0 %406
    %v409 = vmul.f32 %v403, %v407
    %v410 = vmul.f32 %v404, %v407
    %v411 = vadd.f32 %v381, %v409
    %v412 = vadd.f32 %v382, %v410
    %413 = vrot.lane.b32.xlu0 %v193, 111
    %v414 = vpop.permute.xlu0 %413
    %415 = vrot.lane.b32.xlu0 %v194, 111
    %v416 = vpop.permute.xlu0 %415
    %vm417 = vcmp.lt.s32.totalorder %v200, 111
    %v418 = vsel %vm417, %v414, %v416
    %v419 = vsel %vm417, %v416, %v414
    %s420 = scalar_lea.vmem %s5, 16
    %v421 = vld [vmem:[%s420] ss:$8 sm:$0x3]
    %v423 = vlaneseq
    %v424 = vshrl.u32 %v423, 7
    %v425 = vsub.s32 0, %v424
    %v426 = vrot.slane %v421, %v425
    %v427 = vlaneseq
    %v428 = vshrl.u32 %v427, 7
    %v429 = vsub.s32 1, %v428
    %v430 = vrot.slane %v421, %v429
    %v433 = vmul.f32 %v418, %v426
    %v434 = vmul.f32 %v419, %v430
    %435 = vset.pattern.permute.xlu0 8
    %436 = vperm.xlu0 %435, %v80
    %v437 = vpop.permute.xlu0 %436
    %v439 = vmul.f32 %v433, %v437
    %v440 = vmul.f32 %v434, %v437
    %v441 = vadd.f32 %v411, %v439
    %v442 = vadd.f32 %v412, %v440
    %v443 = vld [vmem:[%s4] sm:$0xf]
    %445 = vset.pattern.permute.xlu0 0
    %446 = vperm.xlu0 %445, %v443
    %v447 = vpop.permute.xlu0 %446
    %v449 = vadd.f32 %v441, %v447
    %v450 = vadd.f32 %v442, %v447
    %v451 = vmax.f32 %v449, 0.0
    %v452 = vmax.f32 %v450, 0.0
    %v453 = vld [vmem:[%s6] sm:$0xf]
    %v454 = vld [vmem:[%s8] sm:$0xf]
    %v455 = vlaneseq
    %v456 = vshrl.u32 %v455, 7
    %v457 = vsub.s32 0, %v456
    %v458 = vrot.slane %v193, %v457
    %v459 = vlaneseq
    %v460 = vshrl.u32 %v459, 7
    %v461 = vsub.s32 0, %v460
    %v462 = vrot.slane %v194, %v461
    %464 = vset.pattern.permute.xlu0 0
    %465 = vperm.xlu0 %464, %v453
    %v466 = vpop.permute.xlu0 %465
    %v468 = vmul.f32 %v458, %v466
    %v469 = vmul.f32 %v462, %v466
    %v470 = vlaneseq
    %v471 = vshrl.u32 %v470, 7
    %v472 = vsub.s32 1, %v471
    %v473 = vrot.slane %v193, %v472
    %v474 = vlaneseq
    %v475 = vshrl.u32 %v474, 7
    %v476 = vsub.s32 1, %v475
    %v477 = vrot.slane %v194, %v476
    %478 = vset.pattern.permute.xlu0 1
    %479 = vperm.xlu0 %478, %v453
    %v480 = vpop.permute.xlu0 %479
    %v482 = vmul.f32 %v473, %v480
    %v483 = vmul.f32 %v477, %v480
    %v484 = vadd.f32 %v468, %v482
    %v485 = vadd.f32 %v469, %v483
    %v486 = vlaneseq
    %v487 = vshrl.u32 %v486, 7
    %v488 = vsub.s32 2, %v487
    %v489 = vrot.slane %v193, %v488
    %v490 = vlaneseq
    %v491 = vshrl.u32 %v490, 7
    %v492 = vsub.s32 2, %v491
    %v493 = vrot.slane %v194, %v492
    %494 = vset.pattern.permute.xlu0 2
    %495 = vperm.xlu0 %494, %v453
    %v496 = vpop.permute.xlu0 %495
    %v498 = vmul.f32 %v489, %v496
    %v499 = vmul.f32 %v493, %v496
    %v500 = vadd.f32 %v484, %v498
    %v501 = vadd.f32 %v485, %v499
    %v502 = vlaneseq
    %v503 = vshrl.u32 %v502, 7
    %v504 = vsub.s32 3, %v503
    %v505 = vrot.slane %v193, %v504
    %v506 = vlaneseq
    %v507 = vshrl.u32 %v506, 7
    %v508 = vsub.s32 3, %v507
    %v509 = vrot.slane %v194, %v508
    %510 = vset.pattern.permute.xlu0 3
    %511 = vperm.xlu0 %510, %v453
    %v512 = vpop.permute.xlu0 %511
    %v514 = vmul.f32 %v505, %v512
    %v515 = vmul.f32 %v509, %v512
    %v516 = vadd.f32 %v500, %v514
    %v517 = vadd.f32 %v501, %v515
    %v518 = vlaneseq
    %v519 = vshrl.u32 %v518, 7
    %v520 = vsub.s32 0, %v519
    %v521 = vrot.slane %v451, %v520
    %v522 = vlaneseq
    %v523 = vshrl.u32 %v522, 7
    %v524 = vsub.s32 0, %v523
    %v525 = vrot.slane %v452, %v524
    %526 = vset.pattern.permute.xlu0 4
    %527 = vperm.xlu0 %526, %v453
    %v528 = vpop.permute.xlu0 %527
    %v530 = vmul.f32 %v521, %v528
    %v531 = vmul.f32 %v525, %v528
    %v532 = vadd.f32 %v516, %v530
    %v533 = vadd.f32 %v517, %v531
    %v534 = vlaneseq
    %v535 = vshrl.u32 %v534, 7
    %v536 = vsub.s32 1, %v535
    %v537 = vrot.slane %v451, %v536
    %v538 = vlaneseq
    %v539 = vshrl.u32 %v538, 7
    %v540 = vsub.s32 1, %v539
    %v541 = vrot.slane %v452, %v540
    %542 = vset.pattern.permute.xlu0 5
    %543 = vperm.xlu0 %542, %v453
    %v544 = vpop.permute.xlu0 %543
    %v546 = vmul.f32 %v537, %v544
    %v547 = vmul.f32 %v541, %v544
    %v548 = vadd.f32 %v532, %v546
    %v549 = vadd.f32 %v533, %v547
    %v550 = vlaneseq
    %v551 = vshrl.u32 %v550, 7
    %v552 = vsub.s32 2, %v551
    %v553 = vrot.slane %v451, %v552
    %v554 = vlaneseq
    %v555 = vshrl.u32 %v554, 7
    %v556 = vsub.s32 2, %v555
    %v557 = vrot.slane %v452, %v556
    %558 = vset.pattern.permute.xlu0 6
    %559 = vperm.xlu0 %558, %v453
    %v560 = vpop.permute.xlu0 %559
    %v562 = vmul.f32 %v553, %v560
    %v563 = vmul.f32 %v557, %v560
    %v564 = vadd.f32 %v548, %v562
    %v565 = vadd.f32 %v549, %v563
    %v566 = vlaneseq
    %v567 = vshrl.u32 %v566, 7
    %v568 = vsub.s32 3, %v567
    %v569 = vrot.slane %v451, %v568
    %v570 = vlaneseq
    %v571 = vshrl.u32 %v570, 7
    %v572 = vsub.s32 3, %v571
    %v573 = vrot.slane %v452, %v572
    %574 = vset.pattern.permute.xlu0 7
    %575 = vperm.xlu0 %574, %v453
    %v576 = vpop.permute.xlu0 %575
    %v578 = vmul.f32 %v569, %v576
    %v579 = vmul.f32 %v573, %v576
    %v580 = vadd.f32 %v564, %v578
    %v581 = vadd.f32 %v565, %v579
    %582 = vset.pattern.permute.xlu0 8
    %583 = vperm.xlu0 %582, %v453
    %v584 = vpop.permute.xlu0 %583
    %v586 = vmul.f32 %v95, %v584
    %v587 = vmul.f32 %v99, %v584
    %v588 = vadd.f32 %v580, %v586
    %v589 = vadd.f32 %v581, %v587
    %590 = vset.pattern.permute.xlu0 9
    %591 = vperm.xlu0 %590, %v453
    %v592 = vpop.permute.xlu0 %591
    %v594 = vmul.f32 %v120, %v592
    %v595 = vmul.f32 %v124, %v592
    %v596 = vadd.f32 %v588, %v594
    %v597 = vadd.f32 %v589, %v595
    %598 = vset.pattern.permute.xlu0 10
    %599 = vperm.xlu0 %598, %v453
    %v600 = vpop.permute.xlu0 %599
    %v602 = vmul.f32 %v146, %v600
    %v603 = vmul.f32 %v150, %v600
    %v604 = vadd.f32 %v596, %v602
    %v605 = vadd.f32 %v597, %v603
    %606 = vset.pattern.permute.xlu0 11
    %607 = vperm.xlu0 %606, %v453
    %v608 = vpop.permute.xlu0 %607
    %v610 = vmul.f32 %v172, %v608
    %v611 = vmul.f32 %v176, %v608
    %v612 = vadd.f32 %v604, %v610
    %v613 = vadd.f32 %v605, %v611
    %v614 = vld [vmem:[%s7] sm:$0xf]
    %616 = vset.pattern.permute.xlu0 0
    %617 = vperm.xlu0 %616, %v614
    %v618 = vpop.permute.xlu0 %617
    %v620 = vadd.f32 %v612, %v618
    %v621 = vadd.f32 %v613, %v618
    %v622 = vmax.f32 %v620, 0.0
    %v623 = vmax.f32 %v621, 0.0
    %624 = vrot.lane.b32.xlu0 %v622, 34
    %v625 = vpop.permute.xlu0 %624
    %626 = vrot.lane.b32.xlu0 %v623, 34
    %v627 = vpop.permute.xlu0 %626
    %vm628 = vcmp.lt.s32.totalorder %v200, 34
    %v629 = vsel %vm628, %v625, %v627
    %v630 = vsel %vm628, %v627, %v625
    %v631 = vld [vmem:[#allocation6] ss:$8 sm:$0x3]
    %v633 = vlaneseq
    %v634 = vshrl.u32 %v633, 7
    %v635 = vsub.s32 0, %v634
    %v636 = vrot.slane %v631, %v635
    %v637 = vlaneseq
    %v638 = vshrl.u32 %v637, 7
    %v639 = vsub.s32 1, %v638
    %v640 = vrot.slane %v631, %v639
    %v643 = vmul.f32 %v630, %v636
    %v644 = vmul.f32 %v629, %v640
    %646 = vset.pattern.permute.xlu0 0
    %647 = vperm.xlu0 %646, %v454
    %v648 = vpop.permute.xlu0 %647
    %v650 = vmul.f32 %v643, %v648
    %v651 = vmul.f32 %v644, %v648
    %652 = vrot.lane.b32.xlu0 %v622, 32
    %v653 = vpop.permute.xlu0 %652
    %654 = vrot.lane.b32.xlu0 %v623, 32
    %v655 = vpop.permute.xlu0 %654
    %vm656 = vcmp.lt.s32.totalorder %v200, 32
    %v657 = vsel %vm656, %v653, %v655
    %v658 = vsel %vm656, %v655, %v653
    %s659 = scalar_lea.vmem [#allocation6], 1
    %v660 = vld [vmem:[%s659] ss:$8 sm:$0x3]
    %v662 = vlaneseq
    %v663 = vshrl.u32 %v662, 7
    %v664 = vsub.s32 0, %v663
    %v665 = vrot.slane %v660, %v664
    %v666 = vlaneseq
    %v667 = vshrl.u32 %v666, 7
    %v668 = vsub.s32 1, %v667
    %v669 = vrot.slane %v660, %v668
    %v672 = vmul.f32 %v658, %v665
    %v673 = vmul.f32 %v657, %v669
    %674 = vset.pattern.permute.xlu0 1
    %675 = vperm.xlu0 %674, %v454
    %v676 = vpop.permute.xlu0 %675
    %v678 = vmul.f32 %v672, %v676
    %v679 = vmul.f32 %v673, %v676
    %v680 = vadd.f32 %v650, %v678
    %v681 = vadd.f32 %v651, %v679
    %682 = vrot.lane.b32.xlu0 %v622, 30
    %v683 = vpop.permute.xlu0 %682
    %684 = vrot.lane.b32.xlu0 %v623, 30
    %v685 = vpop.permute.xlu0 %684
    %vm686 = vcmp.lt.s32.totalorder %v200, 30
    %v687 = vsel %vm686, %v683, %v685
    %v688 = vsel %vm686, %v685, %v683
    %s689 = scalar_lea.vmem [#allocation6], 2
    %v690 = vld [vmem:[%s689] ss:$8 sm:$0x3]
    %v692 = vlaneseq
    %v693 = vshrl.u32 %v692, 7
    %v694 = vsub.s32 0, %v693
    %v695 = vrot.slane %v690, %v694
    %v696 = vlaneseq
    %v697 = vshrl.u32 %v696, 7
    %v698 = vsub.s32 1, %v697
    %v699 = vrot.slane %v690, %v698
    %v702 = vmul.f32 %v688, %v695
    %v703 = vmul.f32 %v687, %v699
    %704 = vset.pattern.permute.xlu0 2
    %705 = vperm.xlu0 %704, %v454
    %v706 = vpop.permute.xlu0 %705
    %v708 = vmul.f32 %v702, %v706
    %v709 = vmul.f32 %v703, %v706
    %v710 = vadd.f32 %v680, %v708
    %v711 = vadd.f32 %v681, %v709
    %712 = vrot.lane.b32.xlu0 %v622, 2
    %v713 = vpop.permute.xlu0 %712
    %714 = vrot.lane.b32.xlu0 %v623, 2
    %v715 = vpop.permute.xlu0 %714
    %vm716 = vcmp.lt.s32.totalorder %v200, 2
    %v717 = vsel %vm716, %v713, %v715
    %v718 = vsel %vm716, %v715, %v713
    %s719 = scalar_lea.vmem [#allocation6], 3
    %v720 = vld [vmem:[%s719] ss:$8 sm:$0x3]
    %v722 = vlaneseq
    %v723 = vshrl.u32 %v722, 7
    %v724 = vsub.s32 0, %v723
    %v725 = vrot.slane %v720, %v724
    %v726 = vlaneseq
    %v727 = vshrl.u32 %v726, 7
    %v728 = vsub.s32 1, %v727
    %v729 = vrot.slane %v720, %v728
    %v732 = vmul.f32 %v718, %v725
    %v733 = vmul.f32 %v717, %v729
    %734 = vset.pattern.permute.xlu0 3
    %735 = vperm.xlu0 %734, %v454
    %v736 = vpop.permute.xlu0 %735
    %v738 = vmul.f32 %v732, %v736
    %v739 = vmul.f32 %v733, %v736
    %v740 = vadd.f32 %v710, %v738
    %v741 = vadd.f32 %v711, %v739
    %742 = vset.pattern.permute.xlu0 4
    %743 = vperm.xlu0 %742, %v454
    %v744 = vpop.permute.xlu0 %743
    %v746 = vmul.f32 %v622, %v744
    %v747 = vmul.f32 %v623, %v744
    %v748 = vadd.f32 %v740, %v746
    %v749 = vadd.f32 %v741, %v747
    %750 = vrot.lane.b32.xlu0 %v622, 126
    %v751 = vpop.permute.xlu0 %750
    %752 = vrot.lane.b32.xlu0 %v623, 126
    %v753 = vpop.permute.xlu0 %752
    %vm754 = vcmp.lt.s32.totalorder %v200, 126
    %v755 = vsel %vm754, %v751, %v753
    %v756 = vsel %vm754, %v753, %v751
    %s757 = scalar_lea.vmem [#allocation6], 5
    %v758 = vld [vmem:[%s757] ss:$8 sm:$0x3]
    %v760 = vlaneseq
    %v761 = vshrl.u32 %v760, 7
    %v762 = vsub.s32 0, %v761
    %v763 = vrot.slane %v758, %v762
    %v764 = vlaneseq
    %v765 = vshrl.u32 %v764, 7
    %v766 = vsub.s32 1, %v765
    %v767 = vrot.slane %v758, %v766
    %v770 = vmul.f32 %v755, %v763
    %v771 = vmul.f32 %v756, %v767
    %772 = vset.pattern.permute.xlu0 5
    %773 = vperm.xlu0 %772, %v454
    %v774 = vpop.permute.xlu0 %773
    %v776 = vmul.f32 %v770, %v774
    %v777 = vmul.f32 %v771, %v774
    %v778 = vadd.f32 %v748, %v776
    %v779 = vadd.f32 %v749, %v777
    %780 = vrot.lane.b32.xlu0 %v622, 98
    %v781 = vpop.permute.xlu0 %780
    %782 = vrot.lane.b32.xlu0 %v623, 98
    %v783 = vpop.permute.xlu0 %782
    %vm784 = vcmp.lt.s32.totalorder %v200, 98
    %v785 = vsel %vm784, %v781, %v783
    %v786 = vsel %vm784, %v783, %v781
    %s787 = scalar_lea.vmem [#allocation6], 6
    %v788 = vld [vmem:[%s787] ss:$8 sm:$0x3]
    %v790 = vlaneseq
    %v791 = vshrl.u32 %v790, 7
    %v792 = vsub.s32 0, %v791
    %v793 = vrot.slane %v788, %v792
    %v794 = vlaneseq
    %v795 = vshrl.u32 %v794, 7
    %v796 = vsub.s32 1, %v795
    %v797 = vrot.slane %v788, %v796
    %v800 = vmul.f32 %v785, %v793
    %v801 = vmul.f32 %v786, %v797
    %802 = vset.pattern.permute.xlu0 6
    %803 = vperm.xlu0 %802, %v454
    %v804 = vpop.permute.xlu0 %803
    %v806 = vmul.f32 %v800, %v804
    %v807 = vmul.f32 %v801, %v804
    %v808 = vadd.f32 %v778, %v806
    %v809 = vadd.f32 %v779, %v807
    %810 = vrot.lane.b32.xlu0 %v622, 96
    %v811 = vpop.permute.xlu0 %810
    %812 = vrot.lane.b32.xlu0 %v623, 96
    %v813 = vpop.permute.xlu0 %812
    %vm814 = vcmp.lt.s32.totalorder %v200, 96
    %v815 = vsel %vm814, %v811, %v813
    %v816 = vsel %vm814, %v813, %v811
    %s817 = scalar_lea.vmem [#allocation6], 7
    %v818 = vld [vmem:[%s817] ss:$8 sm:$0x3]
    %v820 = vlaneseq
    %v821 = vshrl.u32 %v820, 7
    %v822 = vsub.s32 0, %v821
    %v823 = vrot.slane %v818, %v822
    %v824 = vlaneseq
    %v825 = vshrl.u32 %v824, 7
    %v826 = vsub.s32 1, %v825
    %v827 = vrot.slane %v818, %v826
    %v830 = vmul.f32 %v815, %v823
    %v831 = vmul.f32 %v816, %v827
    %832 = vset.pattern.permute.xlu0 7
    %833 = vperm.xlu0 %832, %v454
    %v834 = vpop.permute.xlu0 %833
    %v836 = vmul.f32 %v830, %v834
    %v837 = vmul.f32 %v831, %v834
    %v838 = vadd.f32 %v808, %v836
    %v839 = vadd.f32 %v809, %v837
    %840 = vrot.lane.b32.xlu0 %v622, 94
    %v841 = vpop.permute.xlu0 %840
    %842 = vrot.lane.b32.xlu0 %v623, 94
    %v843 = vpop.permute.xlu0 %842
    %vm844 = vcmp.lt.s32.totalorder %v200, 94
    %v845 = vsel %vm844, %v841, %v843
    %v846 = vsel %vm844, %v843, %v841
    %s847 = scalar_lea.vmem [#allocation6], 16
    %v848 = vld [vmem:[%s847] ss:$8 sm:$0x3]
    %v850 = vlaneseq
    %v851 = vshrl.u32 %v850, 7
    %v852 = vsub.s32 0, %v851
    %v853 = vrot.slane %v848, %v852
    %v854 = vlaneseq
    %v855 = vshrl.u32 %v854, 7
    %v856 = vsub.s32 1, %v855
    %v857 = vrot.slane %v848, %v856
    %v860 = vmul.f32 %v845, %v853
    %v861 = vmul.f32 %v846, %v857
    %862 = vset.pattern.permute.xlu0 8
    %863 = vperm.xlu0 %862, %v454
    %v864 = vpop.permute.xlu0 %863
    %v866 = vmul.f32 %v860, %v864
    %v867 = vmul.f32 %v861, %v864
    %v868 = vadd.f32 %v838, %v866
    %v869 = vadd.f32 %v839, %v867
    %v870 = vld [vmem:[%s9] sm:$0xf]
    %872 = vset.pattern.permute.xlu0 0
    %873 = vperm.xlu0 %872, %v870
    %v874 = vpop.permute.xlu0 %873
    %v876 = vadd.f32 %v868, %v874
    %v877 = vadd.f32 %v869, %v874
    %v878 = vmax.f32 %v876, 0.0
    %v879 = vmax.f32 %v877, 0.0
    %v880 = vpack.c.bf16 %v622, %v622
    %v881 = vpack.c.bf16 %v623, %v623
    %v884 = vunpack.c.l.b16 %v880
    %v885 = vunpack.c.l.b16 %v881
    %v886 = vpack.c.b16 %v885, %v884
    %888 = vst [vmem:[%s11] sm:$0x33] %v886
    %v889 = vpack.c.bf16 %v878, %v878
    %v890 = vpack.c.bf16 %v879, %v879
    %v893 = vunpack.c.l.b16 %v889
    %v894 = vunpack.c.l.b16 %v890
    %v895 = vpack.c.b16 %v894, %v893
    %v896 = vrot.slane %v895, 6
    %898 = vst [vmem:[%s11] sm:$0xcc] %v896
    %v899 = vpack.c.bf16 %v193, %v193
    %v900 = vpack.c.bf16 %v194, %v194
    %v903 = vunpack.c.l.b16 %v899
    %v904 = vunpack.c.l.b16 %v900
    %v905 = vpack.c.b16 %v904, %v903
    %907 = vst [vmem:[%s11 + $0x8] sm:$0x33] %v905
    %v908 = vpack.c.bf16 %v451, %v451
    %v909 = vpack.c.bf16 %v452, %v452
    %v912 = vunpack.c.l.b16 %v908
    %v913 = vunpack.c.l.b16 %v909
    %v914 = vpack.c.b16 %v913, %v912
    %v915 = vrot.slane %v914, 6
    %917 = vst [vmem:[%s11 + $0x8] sm:$0xcc] %v915
    %v920 = vunpack.c.l.s4 1983009808
    %v921 = vunpack.c.0.s8 %v920
    %v922 = vlaneseq
    %v923 = vshrl.u32 %v922, 7
    %v924 = vsub.s32 %v921, %v923
    %v925 = vrot.slane %v77, %v924
    %927 = vst [vmem:[%s11 + $0x10] sm:$0x33] %v925
    %s928 = scalar_lea.vmem [#allocation2], 4
    %v929 = vld [vmem:[%s928] sm:$0xf]
    %v930 = vunpack.c.l.bf16 %v929
    %v931 = vld [vmem:[%s1] sm:$0xf]
    %v932 = vld [vmem:[#allocation4] sm:$0xf]
    %v934 = vlaneseq
    %v935 = vshrl.u32 %v934, 7
    %v936 = vsub.s32 0, %v935
    %v937 = vrot.slane %v930, %v936
    %v938 = vlaneseq
    %v939 = vshrl.u32 %v938, 7
    %v940 = vsub.s32 4, %v939
    %v941 = vrot.slane %v930, %v940
    %v944 = vlaneseq
    %v945 = vshrl.u32 %v944, 7
    %v946 = vsub.s32 0, %v945
    %v947 = vrot.slane %v937, %v946
    %v948 = vlaneseq
    %v949 = vshrl.u32 %v948, 7
    %v950 = vsub.s32 0, %v949
    %v951 = vrot.slane %v941, %v950
    %953 = vset.pattern.permute.xlu0 0
    %954 = vperm.xlu0 %953, %v931
    %v955 = vpop.permute.xlu0 %954
    %v957 = vmul.f32 %v947, %v955
    %v958 = vmul.f32 %v951, %v955
    %v959 = vlaneseq
    %v960 = vshrl.u32 %v959, 7
    %v961 = vsub.s32 1, %v960
    %v962 = vrot.slane %v930, %v961
    %v963 = vlaneseq
    %v964 = vshrl.u32 %v963, 7
    %v965 = vsub.s32 5, %v964
    %v966 = vrot.slane %v930, %v965
    %v969 = vlaneseq
    %v970 = vshrl.u32 %v969, 7
    %v971 = vsub.s32 1, %v970
    %v972 = vrot.slane %v962, %v971
    %v973 = vlaneseq
    %v974 = vshrl.u32 %v973, 7
    %v975 = vsub.s32 1, %v974
    %v976 = vrot.slane %v966, %v975
    %977 = vset.pattern.permute.xlu0 1
    %978 = vperm.xlu0 %977, %v931
    %v979 = vpop.permute.xlu0 %978
    %v981 = vmul.f32 %v972, %v979
    %v982 = vmul.f32 %v976, %v979
    %v983 = vadd.f32 %v957, %v981
    %v984 = vadd.f32 %v958, %v982
    %v985 = vlaneseq
    %v986 = vshrl.u32 %v985, 7
    %v987 = vsub.s32 2, %v986
    %v988 = vrot.slane %v930, %v987
    %v989 = vlaneseq
    %v990 = vshrl.u32 %v989, 7
    %v991 = vsub.s32 6, %v990
    %v992 = vrot.slane %v930, %v991
    %v995 = vlaneseq
    %v996 = vshrl.u32 %v995, 7
    %v997 = vsub.s32 2, %v996
    %v998 = vrot.slane %v988, %v997
    %v999 = vlaneseq
    %v1000 = vshrl.u32 %v999, 7
    %v1001 = vsub.s32 2, %v1000
    %v1002 = vrot.slane %v992, %v1001
    %1003 = vset.pattern.permute.xlu0 2
    %1004 = vperm.xlu0 %1003, %v931
    %v1005 = vpop.permute.xlu0 %1004
    %v1007 = vmul.f32 %v998, %v1005
    %v1008 = vmul.f32 %v1002, %v1005
    %v1009 = vadd.f32 %v983, %v1007
    %v1010 = vadd.f32 %v984, %v1008
    %v1011 = vlaneseq
    %v1012 = vshrl.u32 %v1011, 7
    %v1013 = vsub.s32 3, %v1012
    %v1014 = vrot.slane %v930, %v1013
    %v1015 = vlaneseq
    %v1016 = vshrl.u32 %v1015, 7
    %v1017 = vsub.s32 7, %v1016
    %v1018 = vrot.slane %v930, %v1017
    %v1021 = vlaneseq
    %v1022 = vshrl.u32 %v1021, 7
    %v1023 = vsub.s32 3, %v1022
    %v1024 = vrot.slane %v1014, %v1023
    %v1025 = vlaneseq
    %v1026 = vshrl.u32 %v1025, 7
    %v1027 = vsub.s32 3, %v1026
    %v1028 = vrot.slane %v1018, %v1027
    %1029 = vset.pattern.permute.xlu0 3
    %1030 = vperm.xlu0 %1029, %v931
    %v1031 = vpop.permute.xlu0 %1030
    %v1033 = vmul.f32 %v1024, %v1031
    %v1034 = vmul.f32 %v1028, %v1031
    %v1035 = vadd.f32 %v1009, %v1033
    %v1036 = vadd.f32 %v1010, %v1034
    %v1037 = vld [vmem:[%s2] sm:$0xf]
    %1039 = vset.pattern.permute.xlu0 0
    %1040 = vperm.xlu0 %1039, %v1037
    %v1041 = vpop.permute.xlu0 %1040
    %v1043 = vadd.f32 %v1035, %v1041
    %v1044 = vadd.f32 %v1036, %v1041
    %v1045 = vmax.f32 %v1043, 0.0
    %v1046 = vmax.f32 %v1044, 0.0
    %1047 = vrot.lane.b32.xlu0 %v1045, 17
    %v1048 = vpop.permute.xlu0 %1047
    %1049 = vrot.lane.b32.xlu0 %v1046, 17
    %v1050 = vpop.permute.xlu0 %1049
    %v1051 = vsel %vm201, %v1048, %v1050
    %v1052 = vsel %vm201, %v1050, %v1048
    %v1053 = vld [vmem:[%s5] ss:$8 sm:$0x3]
    %v1055 = vlaneseq
    %v1056 = vshrl.u32 %v1055, 7
    %v1057 = vsub.s32 0, %v1056
    %v1058 = vrot.slane %v1053, %v1057
    %v1059 = vlaneseq
    %v1060 = vshrl.u32 %v1059, 7
    %v1061 = vsub.s32 1, %v1060
    %v1062 = vrot.slane %v1053, %v1061
    %v1065 = vmul.f32 %v1052, %v1058
    %v1066 = vmul.f32 %v1051, %v1062
    %1068 = vset.pattern.permute.xlu0 0
    %1069 = vperm.xlu0 %1068, %v932
    %v1070 = vpop.permute.xlu0 %1069
    %v1072 = vmul.f32 %v1065, %v1070
    %v1073 = vmul.f32 %v1066, %v1070
    %1074 = vrot.lane.b32.xlu0 %v1045, 16
    %v1075 = vpop.permute.xlu0 %1074
    %1076 = vrot.lane.b32.xlu0 %v1046, 16
    %v1077 = vpop.permute.xlu0 %1076
    %v1078 = vsel %vm229, %v1075, %v1077
    %v1079 = vsel %vm229, %v1077, %v1075
    %v1080 = vld [vmem:[%s232] ss:$8 sm:$0x3]
    %v1082 = vlaneseq
    %v1083 = vshrl.u32 %v1082, 7
    %v1084 = vsub.s32 0, %v1083
    %v1085 = vrot.slane %v1080, %v1084
    %v1086 = vlaneseq
    %v1087 = vshrl.u32 %v1086, 7
    %v1088 = vsub.s32 1, %v1087
    %v1089 = vrot.slane %v1080, %v1088
    %v1092 = vmul.f32 %v1079, %v1085
    %v1093 = vmul.f32 %v1078, %v1089
    %1094 = vset.pattern.permute.xlu0 1
    %1095 = vperm.xlu0 %1094, %v932
    %v1096 = vpop.permute.xlu0 %1095
    %v1098 = vmul.f32 %v1092, %v1096
    %v1099 = vmul.f32 %v1093, %v1096
    %v1100 = vadd.f32 %v1072, %v1098
    %v1101 = vadd.f32 %v1073, %v1099
    %1102 = vrot.lane.b32.xlu0 %v1045, 15
    %v1103 = vpop.permute.xlu0 %1102
    %1104 = vrot.lane.b32.xlu0 %v1046, 15
    %v1105 = vpop.permute.xlu0 %1104
    %v1106 = vsel %vm259, %v1103, %v1105
    %v1107 = vsel %vm259, %v1105, %v1103
    %v1108 = vld [vmem:[%s262] ss:$8 sm:$0x3]
    %v1110 = vlaneseq
    %v1111 = vshrl.u32 %v1110, 7
    %v1112 = vsub.s32 0, %v1111
    %v1113 = vrot.slane %v1108, %v1112
    %v1114 = vlaneseq
    %v1115 = vshrl.u32 %v1114, 7
    %v1116 = vsub.s32 1, %v1115
    %v1117 = vrot.slane %v1108, %v1116
    %v1120 = vmul.f32 %v1107, %v1113
    %v1121 = vmul.f32 %v1106, %v1117
    %1122 = vset.pattern.permute.xlu0 2
    %1123 = vperm.xlu0 %1122, %v932
    %v1124 = vpop.permute.xlu0 %1123
    %v1126 = vmul.f32 %v1120, %v1124
    %v1127 = vmul.f32 %v1121, %v1124
    %v1128 = vadd.f32 %v1100, %v1126
    %v1129 = vadd.f32 %v1101, %v1127
    %1130 = vrot.lane.b32.xlu0 %v1045, 1
    %v1131 = vpop.permute.xlu0 %1130
    %1132 = vrot.lane.b32.xlu0 %v1046, 1
    %v1133 = vpop.permute.xlu0 %1132
    %v1134 = vsel %vm289, %v1131, %v1133
    %v1135 = vsel %vm289, %v1133, %v1131
    %v1136 = vld [vmem:[%s292] ss:$8 sm:$0x3]
    %v1138 = vlaneseq
    %v1139 = vshrl.u32 %v1138, 7
    %v1140 = vsub.s32 0, %v1139
    %v1141 = vrot.slane %v1136, %v1140
    %v1142 = vlaneseq
    %v1143 = vshrl.u32 %v1142, 7
    %v1144 = vsub.s32 1, %v1143
    %v1145 = vrot.slane %v1136, %v1144
    %v1148 = vmul.f32 %v1135, %v1141
    %v1149 = vmul.f32 %v1134, %v1145
    %1150 = vset.pattern.permute.xlu0 3
    %1151 = vperm.xlu0 %1150, %v932
    %v1152 = vpop.permute.xlu0 %1151
    %v1154 = vmul.f32 %v1148, %v1152
    %v1155 = vmul.f32 %v1149, %v1152
    %v1156 = vadd.f32 %v1128, %v1154
    %v1157 = vadd.f32 %v1129, %v1155
    %1158 = vset.pattern.permute.xlu0 4
    %1159 = vperm.xlu0 %1158, %v932
    %v1160 = vpop.permute.xlu0 %1159
    %v1162 = vmul.f32 %v1045, %v1160
    %v1163 = vmul.f32 %v1046, %v1160
    %v1164 = vadd.f32 %v1156, %v1162
    %v1165 = vadd.f32 %v1157, %v1163
    %1166 = vrot.lane.b32.xlu0 %v1045, 127
    %v1167 = vpop.permute.xlu0 %1166
    %1168 = vrot.lane.b32.xlu0 %v1046, 127
    %v1169 = vpop.permute.xlu0 %1168
    %v1170 = vsel %vm327, %v1167, %v1169
    %v1171 = vsel %vm327, %v1169, %v1167
    %v1172 = vld [vmem:[%s330] ss:$8 sm:$0x3]
    %v1174 = vlaneseq
    %v1175 = vshrl.u32 %v1174, 7
    %v1176 = vsub.s32 0, %v1175
    %v1177 = vrot.slane %v1172, %v1176
    %v1178 = vlaneseq
    %v1179 = vshrl.u32 %v1178, 7
    %v1180 = vsub.s32 1, %v1179
    %v1181 = vrot.slane %v1172, %v1180
    %v1184 = vmul.f32 %v1170, %v1177
    %v1185 = vmul.f32 %v1171, %v1181
    %1186 = vset.pattern.permute.xlu0 5
    %1187 = vperm.xlu0 %1186, %v932
    %v1188 = vpop.permute.xlu0 %1187
    %v1190 = vmul.f32 %v1184, %v1188
    %v1191 = vmul.f32 %v1185, %v1188
    %v1192 = vadd.f32 %v1164, %v1190
    %v1193 = vadd.f32 %v1165, %v1191
    %1194 = vrot.lane.b32.xlu0 %v1045, 113
    %v1195 = vpop.permute.xlu0 %1194
    %1196 = vrot.lane.b32.xlu0 %v1046, 113
    %v1197 = vpop.permute.xlu0 %1196
    %v1198 = vsel %vm357, %v1195, %v1197
    %v1199 = vsel %vm357, %v1197, %v1195
    %v1200 = vld [vmem:[%s360] ss:$8 sm:$0x3]
    %v1202 = vlaneseq
    %v1203 = vshrl.u32 %v1202, 7
    %v1204 = vsub.s32 0, %v1203
    %v1205 = vrot.slane %v1200, %v1204
    %v1206 = vlaneseq
    %v1207 = vshrl.u32 %v1206, 7
    %v1208 = vsub.s32 1, %v1207
    %v1209 = vrot.slane %v1200, %v1208
    %v1212 = vmul.f32 %v1198, %v1205
    %v1213 = vmul.f32 %v1199, %v1209
    %1214 = vset.pattern.permute.xlu0 6
    %1215 = vperm.xlu0 %1214, %v932
    %v1216 = vpop.permute.xlu0 %1215
    %v1218 = vmul.f32 %v1212, %v1216
    %v1219 = vmul.f32 %v1213, %v1216
    %v1220 = vadd.f32 %v1192, %v1218
    %v1221 = vadd.f32 %v1193, %v1219
    %1222 = vrot.lane.b32.xlu0 %v1045, 112
    %v1223 = vpop.permute.xlu0 %1222
    %1224 = vrot.lane.b32.xlu0 %v1046, 112
    %v1225 = vpop.permute.xlu0 %1224
    %v1226 = vsel %vm387, %v1223, %v1225
    %v1227 = vsel %vm387, %v1225, %v1223
    %v1228 = vld [vmem:[%s390] ss:$8 sm:$0x3]
    %v1230 = vlaneseq
    %v1231 = vshrl.u32 %v1230, 7
    %v1232 = vsub.s32 0, %v1231
    %v1233 = vrot.slane %v1228, %v1232
    %v1234 = vlaneseq
    %v1235 = vshrl.u32 %v1234, 7
    %v1236 = vsub.s32 1, %v1235
    %v1237 = vrot.slane %v1228, %v1236
    %v1240 = vmul.f32 %v1226, %v1233
    %v1241 = vmul.f32 %v1227, %v1237
    %1242 = vset.pattern.permute.xlu0 7
    %1243 = vperm.xlu0 %1242, %v932
    %v1244 = vpop.permute.xlu0 %1243
    %v1246 = vmul.f32 %v1240, %v1244
    %v1247 = vmul.f32 %v1241, %v1244
    %v1248 = vadd.f32 %v1220, %v1246
    %v1249 = vadd.f32 %v1221, %v1247
    %1250 = vrot.lane.b32.xlu0 %v1045, 111
    %v1251 = vpop.permute.xlu0 %1250
    %1252 = vrot.lane.b32.xlu0 %v1046, 111
    %v1253 = vpop.permute.xlu0 %1252
    %v1254 = vsel %vm417, %v1251, %v1253
    %v1255 = vsel %vm417, %v1253, %v1251
    %v1256 = vld [vmem:[%s420] ss:$8 sm:$0x3]
    %v1258 = vlaneseq
    %v1259 = vshrl.u32 %v1258, 7
    %v1260 = vsub.s32 0, %v1259
    %v1261 = vrot.slane %v1256, %v1260
    %v1262 = vlaneseq
    %v1263 = vshrl.u32 %v1262, 7
    %v1264 = vsub.s32 1, %v1263
    %v1265 = vrot.slane %v1256, %v1264
    %v1268 = vmul.f32 %v1254, %v1261
    %v1269 = vmul.f32 %v1255, %v1265
    %1270 = vset.pattern.permute.xlu0 8
    %1271 = vperm.xlu0 %1270, %v932
    %v1272 = vpop.permute.xlu0 %1271
    %v1274 = vmul.f32 %v1268, %v1272
    %v1275 = vmul.f32 %v1269, %v1272
    %v1276 = vadd.f32 %v1248, %v1274
    %v1277 = vadd.f32 %v1249, %v1275
    %v1278 = vld [vmem:[%s4] sm:$0xf]
    %1280 = vset.pattern.permute.xlu0 0
    %1281 = vperm.xlu0 %1280, %v1278
    %v1282 = vpop.permute.xlu0 %1281
    %v1284 = vadd.f32 %v1276, %v1282
    %v1285 = vadd.f32 %v1277, %v1282
    %v1286 = vmax.f32 %v1284, 0.0
    %v1287 = vmax.f32 %v1285, 0.0
    %v1288 = vld [vmem:[%s6] sm:$0xf]
    %v1289 = vld [vmem:[%s8] sm:$0xf]
    %v1290 = vlaneseq
    %v1291 = vshrl.u32 %v1290, 7
    %v1292 = vsub.s32 0, %v1291
    %v1293 = vrot.slane %v1045, %v1292
    %v1294 = vlaneseq
    %v1295 = vshrl.u32 %v1294, 7
    %v1296 = vsub.s32 0, %v1295
    %v1297 = vrot.slane %v1046, %v1296
    %1299 = vset.pattern.permute.xlu0 0
    %1300 = vperm.xlu0 %1299, %v1288
    %v1301 = vpop.permute.xlu0 %1300
    %v1303 = vmul.f32 %v1293, %v1301
    %v1304 = vmul.f32 %v1297, %v1301
    %v1305 = vlaneseq
    %v1306 = vshrl.u32 %v1305, 7
    %v1307 = vsub.s32 1, %v1306
    %v1308 = vrot.slane %v1045, %v1307
    %v1309 = vlaneseq
    %v1310 = vshrl.u32 %v1309, 7
    %v1311 = vsub.s32 1, %v1310
    %v1312 = vrot.slane %v1046, %v1311
    %1313 = vset.pattern.permute.xlu0 1
    %1314 = vperm.xlu0 %1313, %v1288
    %v1315 = vpop.permute.xlu0 %1314
    %v1317 = vmul.f32 %v1308, %v1315
    %v1318 = vmul.f32 %v1312, %v1315
    %v1319 = vadd.f32 %v1303, %v1317
    %v1320 = vadd.f32 %v1304, %v1318
    %v1321 = vlaneseq
    %v1322 = vshrl.u32 %v1321, 7
    %v1323 = vsub.s32 2, %v1322
    %v1324 = vrot.slane %v1045, %v1323
    %v1325 = vlaneseq
    %v1326 = vshrl.u32 %v1325, 7
    %v1327 = vsub.s32 2, %v1326
    %v1328 = vrot.slane %v1046, %v1327
    %1329 = vset.pattern.permute.xlu0 2
    %1330 = vperm.xlu0 %1329, %v1288
    %v1331 = vpop.permute.xlu0 %1330
    %v1333 = vmul.f32 %v1324, %v1331
    %v1334 = vmul.f32 %v1328, %v1331
    %v1335 = vadd.f32 %v1319, %v1333
    %v1336 = vadd.f32 %v1320, %v1334
    %v1337 = vlaneseq
    %v1338 = vshrl.u32 %v1337, 7
    %v1339 = vsub.s32 3, %v1338
    %v1340 = vrot.slane %v1045, %v1339
    %v1341 = vlaneseq
    %v1342 = vshrl.u32 %v1341, 7
    %v1343 = vsub.s32 3, %v1342
    %v1344 = vrot.slane %v1046, %v1343
    %1345 = vset.pattern.permute.xlu0 3
    %1346 = vperm.xlu0 %1345, %v1288
    %v1347 = vpop.permute.xlu0 %1346
    %v1349 = vmul.f32 %v1340, %v1347
    %v1350 = vmul.f32 %v1344, %v1347
    %v1351 = vadd.f32 %v1335, %v1349
    %v1352 = vadd.f32 %v1336, %v1350
    %v1353 = vlaneseq
    %v1354 = vshrl.u32 %v1353, 7
    %v1355 = vsub.s32 0, %v1354
    %v1356 = vrot.slane %v1286, %v1355
    %v1357 = vlaneseq
    %v1358 = vshrl.u32 %v1357, 7
    %v1359 = vsub.s32 0, %v1358
    %v1360 = vrot.slane %v1287, %v1359
    %1361 = vset.pattern.permute.xlu0 4
    %1362 = vperm.xlu0 %1361, %v1288
    %v1363 = vpop.permute.xlu0 %1362
    %v1365 = vmul.f32 %v1356, %v1363
    %v1366 = vmul.f32 %v1360, %v1363
    %v1367 = vadd.f32 %v1351, %v1365
    %v1368 = vadd.f32 %v1352, %v1366
    %v1369 = vlaneseq
    %v1370 = vshrl.u32 %v1369, 7
    %v1371 = vsub.s32 1, %v1370
    %v1372 = vrot.slane %v1286, %v1371
    %v1373 = vlaneseq
    %v1374 = vshrl.u32 %v1373, 7
    %v1375 = vsub.s32 1, %v1374
    %v1376 = vrot.slane %v1287, %v1375
    %1377 = vset.pattern.permute.xlu0 5
    %1378 = vperm.xlu0 %1377, %v1288
    %v1379 = vpop.permute.xlu0 %1378
    %v1381 = vmul.f32 %v1372, %v1379
    %v1382 = vmul.f32 %v1376, %v1379
    %v1383 = vadd.f32 %v1367, %v1381
    %v1384 = vadd.f32 %v1368, %v1382
    %v1385 = vlaneseq
    %v1386 = vshrl.u32 %v1385, 7
    %v1387 = vsub.s32 2, %v1386
    %v1388 = vrot.slane %v1286, %v1387
    %v1389 = vlaneseq
    %v1390 = vshrl.u32 %v1389, 7
    %v1391 = vsub.s32 2, %v1390
    %v1392 = vrot.slane %v1287, %v1391
    %1393 = vset.pattern.permute.xlu0 6
    %1394 = vperm.xlu0 %1393, %v1288
    %v1395 = vpop.permute.xlu0 %1394
    %v1397 = vmul.f32 %v1388, %v1395
    %v1398 = vmul.f32 %v1392, %v1395
    %v1399 = vadd.f32 %v1383, %v1397
    %v1400 = vadd.f32 %v1384, %v1398
    %v1401 = vlaneseq
    %v1402 = vshrl.u32 %v1401, 7
    %v1403 = vsub.s32 3, %v1402
    %v1404 = vrot.slane %v1286, %v1403
    %v1405 = vlaneseq
    %v1406 = vshrl.u32 %v1405, 7
    %v1407 = vsub.s32 3, %v1406
    %v1408 = vrot.slane %v1287, %v1407
    %1409 = vset.pattern.permute.xlu0 7
    %1410 = vperm.xlu0 %1409, %v1288
    %v1411 = vpop.permute.xlu0 %1410
    %v1413 = vmul.f32 %v1404, %v1411
    %v1414 = vmul.f32 %v1408, %v1411
    %v1415 = vadd.f32 %v1399, %v1413
    %v1416 = vadd.f32 %v1400, %v1414
    %1417 = vset.pattern.permute.xlu0 8
    %1418 = vperm.xlu0 %1417, %v1288
    %v1419 = vpop.permute.xlu0 %1418
    %v1421 = vmul.f32 %v947, %v1419
    %v1422 = vmul.f32 %v951, %v1419
    %v1423 = vadd.f32 %v1415, %v1421
    %v1424 = vadd.f32 %v1416, %v1422
    %1425 = vset.pattern.permute.xlu0 9
    %1426 = vperm.xlu0 %1425, %v1288
    %v1427 = vpop.permute.xlu0 %1426
    %v1429 = vmul.f32 %v972, %v1427
    %v1430 = vmul.f32 %v976, %v1427
    %v1431 = vadd.f32 %v1423, %v1429
    %v1432 = vadd.f32 %v1424, %v1430
    %1433 = vset.pattern.permute.xlu0 10
    %1434 = vperm.xlu0 %1433, %v1288
    %v1435 = vpop.permute.xlu0 %1434
    %v1437 = vmul.f32 %v998, %v1435
    %v1438 = vmul.f32 %v1002, %v1435
    %v1439 = vadd.f32 %v1431, %v1437
    %v1440 = vadd.f32 %v1432, %v1438
    %1441 = vset.pattern.permute.xlu0 11
    %1442 = vperm.xlu0 %1441, %v1288
    %v1443 = vpop.permute.xlu0 %1442
    %v1445 = vmul.f32 %v1024, %v1443
    %v1446 = vmul.f32 %v1028, %v1443
    %v1447 = vadd.f32 %v1439, %v1445
    %v1448 = vadd.f32 %v1440, %v1446
    %v1449 = vld [vmem:[%s7] sm:$0xf]
    %1451 = vset.pattern.permute.xlu0 0
    %1452 = vperm.xlu0 %1451, %v1449
    %v1453 = vpop.permute.xlu0 %1452
    %v1455 = vadd.f32 %v1447, %v1453
    %v1456 = vadd.f32 %v1448, %v1453
    %v1457 = vmax.f32 %v1455, 0.0
    %v1458 = vmax.f32 %v1456, 0.0
    %1459 = vrot.lane.b32.xlu0 %v1457, 34
    %v1460 = vpop.permute.xlu0 %1459
    %1461 = vrot.lane.b32.xlu0 %v1458, 34
    %v1462 = vpop.permute.xlu0 %1461
    %v1463 = vsel %vm628, %v1460, %v1462
    %v1464 = vsel %vm628, %v1462, %v1460
    %v1465 = vld [vmem:[#allocation6] ss:$8 sm:$0x3]
    %v1467 = vlaneseq
    %v1468 = vshrl.u32 %v1467, 7
    %v1469 = vsub.s32 0, %v1468
    %v1470 = vrot.slane %v1465, %v1469
    %v1471 = vlaneseq
    %v1472 = vshrl.u32 %v1471, 7
    %v1473 = vsub.s32 1, %v1472
    %v1474 = vrot.slane %v1465, %v1473
    %v1477 = vmul.f32 %v1464, %v1470
    %v1478 = vmul.f32 %v1463, %v1474
    %1480 = vset.pattern.permute.xlu0 0
    %1481 = vperm.xlu0 %1480, %v1289
    %v1482 = vpop.permute.xlu0 %1481
    %v1484 = vmul.f32 %v1477, %v1482
    %v1485 = vmul.f32 %v1478, %v1482
    %1486 = vrot.lane.b32.xlu0 %v1457, 32
    %v1487 = vpop.permute.xlu0 %1486
    %1488 = vrot.lane.b32.xlu0 %v1458, 32
    %v1489 = vpop.permute.xlu0 %1488
    %v1490 = vsel %vm656, %v1487, %v1489
    %v1491 = vsel %vm656, %v1489, %v1487
    %v1492 = vld [vmem:[%s659] ss:$8 sm:$0x3]
    %v1494 = vlaneseq
    %v1495 = vshrl.u32 %v1494, 7
    %v1496 = vsub.s32 0, %v1495
    %v1497 = vrot.slane %v1492, %v1496
    %v1498 = vlaneseq
    %v1499 = vshrl.u32 %v1498, 7
    %v1500 = vsub.s32 1, %v1499
    %v1501 = vrot.slane %v1492, %v1500
    %v1504 = vmul.f32 %v1491, %v1497
    %v1505 = vmul.f32 %v1490, %v1501
    %1506 = vset.pattern.permute.xlu0 1
    %1507 = vperm.xlu0 %1506, %v1289
    %v1508 = vpop.permute.xlu0 %1507
    %v1510 = vmul.f32 %v1504, %v1508
    %v1511 = vmul.f32 %v1505, %v1508
    %v1512 = vadd.f32 %v1484, %v1510
    %v1513 = vadd.f32 %v1485, %v1511
    %1514 = vrot.lane.b32.xlu0 %v1457, 30
    %v1515 = vpop.permute.xlu0 %1514
    %1516 = vrot.lane.b32.xlu0 %v1458, 30
    %v1517 = vpop.permute.xlu0 %1516
    %v1518 = vsel %vm686, %v1515, %v1517
    %v1519 = vsel %vm686, %v1517, %v1515
    %v1520 = vld [vmem:[%s689] ss:$8 sm:$0x3]
    %v1522 = vlaneseq
    %v1523 = vshrl.u32 %v1522, 7
    %v1524 = vsub.s32 0, %v1523
    %v1525 = vrot.slane %v1520, %v1524
    %v1526 = vlaneseq
    %v1527 = vshrl.u32 %v1526, 7
    %v1528 = vsub.s32 1, %v1527
    %v1529 = vrot.slane %v1520, %v1528
    %v1532 = vmul.f32 %v1519, %v1525
    %v1533 = vmul.f32 %v1518, %v1529
    %1534 = vset.pattern.permute.xlu0 2
    %1535 = vperm.xlu0 %1534, %v1289
    %v1536 = vpop.permute.xlu0 %1535
    %v1538 = vmul.f32 %v1532, %v1536
    %v1539 = vmul.f32 %v1533, %v1536
    %v1540 = vadd.f32 %v1512, %v1538
    %v1541 = vadd.f32 %v1513, %v1539
    %1542 = vrot.lane.b32.xlu0 %v1457, 2
    %v1543 = vpop.permute.xlu0 %1542
    %1544 = vrot.lane.b32.xlu0 %v1458, 2
    %v1545 = vpop.permute.xlu0 %1544
    %v1546 = vsel %vm716, %v1543, %v1545
    %v1547 = vsel %vm716, %v1545, %v1543
    %v1548 = vld [vmem:[%s719] ss:$8 sm:$0x3]
    %v1550 = vlaneseq
    %v1551 = vshrl.u32 %v1550, 7
    %v1552 = vsub.s32 0, %v1551
    %v1553 = vrot.slane %v1548, %v1552
    %v1554 = vlaneseq
    %v1555 = vshrl.u32 %v1554, 7
    %v1556 = vsub.s32 1, %v1555
    %v1557 = vrot.slane %v1548, %v1556
    %v1560 = vmul.f32 %v1547, %v1553
    %v1561 = vmul.f32 %v1546, %v1557
    %1562 = vset.pattern.permute.xlu0 3
    %1563 = vperm.xlu0 %1562, %v1289
    %v1564 = vpop.permute.xlu0 %1563
    %v1566 = vmul.f32 %v1560, %v1564
    %v1567 = vmul.f32 %v1561, %v1564
    %v1568 = vadd.f32 %v1540, %v1566
    %v1569 = vadd.f32 %v1541, %v1567
    %1570 = vset.pattern.permute.xlu0 4
    %1571 = vperm.xlu0 %1570, %v1289
    %v1572 = vpop.permute.xlu0 %1571
    %v1574 = vmul.f32 %v1457, %v1572
    %v1575 = vmul.f32 %v1458, %v1572
    %v1576 = vadd.f32 %v1568, %v1574
    %v1577 = vadd.f32 %v1569, %v1575
    %1578 = vrot.lane.b32.xlu0 %v1457, 126
    %v1579 = vpop.permute.xlu0 %1578
    %1580 = vrot.lane.b32.xlu0 %v1458, 126
    %v1581 = vpop.permute.xlu0 %1580
    %v1582 = vsel %vm754, %v1579, %v1581
    %v1583 = vsel %vm754, %v1581, %v1579
    %v1584 = vld [vmem:[%s757] ss:$8 sm:$0x3]
    %v1586 = vlaneseq
    %v1587 = vshrl.u32 %v1586, 7
    %v1588 = vsub.s32 0, %v1587
    %v1589 = vrot.slane %v1584, %v1588
    %v1590 = vlaneseq
    %v1591 = vshrl.u32 %v1590, 7
    %v1592 = vsub.s32 1, %v1591
    %v1593 = vrot.slane %v1584, %v1592
    %v1596 = vmul.f32 %v1582, %v1589
    %v1597 = vmul.f32 %v1583, %v1593
    %1598 = vset.pattern.permute.xlu0 5
    %1599 = vperm.xlu0 %1598, %v1289
    %v1600 = vpop.permute.xlu0 %1599
    %v1602 = vmul.f32 %v1596, %v1600
    %v1603 = vmul.f32 %v1597, %v1600
    %v1604 = vadd.f32 %v1576, %v1602
    %v1605 = vadd.f32 %v1577, %v1603
    %1606 = vrot.lane.b32.xlu0 %v1457, 98
    %v1607 = vpop.permute.xlu0 %1606
    %1608 = vrot.lane.b32.xlu0 %v1458, 98
    %v1609 = vpop.permute.xlu0 %1608
    %v1610 = vsel %vm784, %v1607, %v1609
    %v1611 = vsel %vm784, %v1609, %v1607
    %v1612 = vld [vmem:[%s787] ss:$8 sm:$0x3]
    %v1614 = vlaneseq
    %v1615 = vshrl.u32 %v1614, 7
    %v1616 = vsub.s32 0, %v1615
    %v1617 = vrot.slane %v1612, %v1616
    %v1618 = vlaneseq
    %v1619 = vshrl.u32 %v1618, 7
    %v1620 = vsub.s32 1, %v1619
    %v1621 = vrot.slane %v1612, %v1620
    %v1624 = vmul.f32 %v1610, %v1617
    %v1625 = vmul.f32 %v1611, %v1621
    %1626 = vset.pattern.permute.xlu0 6
    %1627 = vperm.xlu0 %1626, %v1289
    %v1628 = vpop.permute.xlu0 %1627
    %v1630 = vmul.f32 %v1624, %v1628
    %v1631 = vmul.f32 %v1625, %v1628
    %v1632 = vadd.f32 %v1604, %v1630
    %v1633 = vadd.f32 %v1605, %v1631
    %1634 = vrot.lane.b32.xlu0 %v1457, 96
    %v1635 = vpop.permute.xlu0 %1634
    %1636 = vrot.lane.b32.xlu0 %v1458, 96
    %v1637 = vpop.permute.xlu0 %1636
    %v1638 = vsel %vm814, %v1635, %v1637
    %v1639 = vsel %vm814, %v1637, %v1635
    %v1640 = vld [vmem:[%s817] ss:$8 sm:$0x3]
    %v1642 = vlaneseq
    %v1643 = vshrl.u32 %v1642, 7
    %v1644 = vsub.s32 0, %v1643
    %v1645 = vrot.slane %v1640, %v1644
    %v1646 = vlaneseq
    %v1647 = vshrl.u32 %v1646, 7
    %v1648 = vsub.s32 1, %v1647
    %v1649 = vrot.slane %v1640, %v1648
    %v1652 = vmul.f32 %v1638, %v1645
    %v1653 = vmul.f32 %v1639, %v1649
    %1654 = vset.pattern.permute.xlu0 7
    %1655 = vperm.xlu0 %1654, %v1289
    %v1656 = vpop.permute.xlu0 %1655
    %v1658 = vmul.f32 %v1652, %v1656
    %v1659 = vmul.f32 %v1653, %v1656
    %v1660 = vadd.f32 %v1632, %v1658
    %v1661 = vadd.f32 %v1633, %v1659
    %1662 = vrot.lane.b32.xlu0 %v1457, 94
    %v1663 = vpop.permute.xlu0 %1662
    %1664 = vrot.lane.b32.xlu0 %v1458, 94
    %v1665 = vpop.permute.xlu0 %1664
    %v1666 = vsel %vm844, %v1663, %v1665
    %v1667 = vsel %vm844, %v1665, %v1663
    %v1668 = vld [vmem:[%s847] ss:$8 sm:$0x3]
    %v1670 = vlaneseq
    %v1671 = vshrl.u32 %v1670, 7
    %v1672 = vsub.s32 0, %v1671
    %v1673 = vrot.slane %v1668, %v1672
    %v1674 = vlaneseq
    %v1675 = vshrl.u32 %v1674, 7
    %v1676 = vsub.s32 1, %v1675
    %v1677 = vrot.slane %v1668, %v1676
    %v1680 = vmul.f32 %v1666, %v1673
    %v1681 = vmul.f32 %v1667, %v1677
    %1682 = vset.pattern.permute.xlu0 8
    %1683 = vperm.xlu0 %1682, %v1289
    %v1684 = vpop.permute.xlu0 %1683
    %v1686 = vmul.f32 %v1680, %v1684
    %v1687 = vmul.f32 %v1681, %v1684
    %v1688 = vadd.f32 %v1660, %v1686
    %v1689 = vadd.f32 %v1661, %v1687
    %v1690 = vld [vmem:[%s9] sm:$0xf]
    %1692 = vset.pattern.permute.xlu0 0
    %1693 = vperm.xlu0 %1692, %v1690
    %v1694 = vpop.permute.xlu0 %1693
    %v1696 = vadd.f32 %v1688, %v1694
    %v1697 = vadd.f32 %v1689, %v1694
    %v1698 = vmax.f32 %v1696, 0.0
    %v1699 = vmax.f32 %v1697, 0.0
    %v1700 = vpack.c.bf16 %v1457, %v1457
    %v1701 = vpack.c.bf16 %v1458, %v1458
    %v1704 = vunpack.c.l.b16 %v1700
    %v1705 = vunpack.c.l.b16 %v1701
    %v1706 = vpack.c.b16 %v1705, %v1704
    %s1708 = scalar_lea.vmem %s11, 24
    %1709 = vst [vmem:[%s1708] sm:$0x33] %v1706
    %v1710 = vpack.c.bf16 %v1698, %v1698
    %v1711 = vpack.c.bf16 %v1699, %v1699
    %v1714 = vunpack.c.l.b16 %v1710
    %v1715 = vunpack.c.l.b16 %v1711
    %v1716 = vpack.c.b16 %v1715, %v1714
    %v1717 = vrot.slane %v1716, 6
    %1719 = vst [vmem:[%s1708] sm:$0xcc] %v1717
    %v1720 = vpack.c.bf16 %v1045, %v1045
    %v1721 = vpack.c.bf16 %v1046, %v1046
    %v1724 = vunpack.c.l.b16 %v1720
    %v1725 = vunpack.c.l.b16 %v1721
    %v1726 = vpack.c.b16 %v1725, %v1724
    %1728 = vst [vmem:[%s1708 + $0x8] sm:$0x33] %v1726
    %v1729 = vpack.c.bf16 %v1286, %v1286
    %v1730 = vpack.c.bf16 %v1287, %v1287
    %v1733 = vunpack.c.l.b16 %v1729
    %v1734 = vunpack.c.l.b16 %v1730
    %v1735 = vpack.c.b16 %v1734, %v1733
    %v1736 = vrot.slane %v1735, 6
    %1738 = vst [vmem:[%s1708 + $0x8] sm:$0xcc] %v1736
    %v1741 = vunpack.c.l.s4 1983009808
    %v1742 = vunpack.c.0.s8 %v1741
    %v1743 = vlaneseq
    %v1744 = vshrl.u32 %v1743, 7
    %v1745 = vsub.s32 %v1742, %v1744
    %v1746 = vrot.slane %v929, %v1745
    %1748 = vst [vmem:[%s1708 + $0x10] sm:$0x33] %v1746
    // Predicated region
    $region58: #{tpu_custom_call.1} parent=1 // pred_check
      _
    $region59: #{tpu_custom_call.1} parent=1 // pred_check_branch
      %1750 = sbr.rel (0) target = $region61
    $region60: #{tpu_custom_call.1} parent=1 // pred_region
      _
    $region61: #{tpu_custom_call.1} parent=1 // pred_fallthru
      _
    // Predicated region
    $region62: #{tpu_custom_call.1} parent=1 // pred_check
      _
    $region63: #{tpu_custom_call.1} parent=1 // pred_check_branch
      %1752 = sbr.rel (0) target = $region65
    $region64: #{tpu_custom_call.1} parent=1 // pred_region
      _
    $region65: #{tpu_custom_call.1} parent=1 // pred_fallthru
      _
    %1753 = vsyncpa [#allocation3], 1
    %1754 = vsyncpa [#allocation5], 1

</llo_original>
